<compile_context>
chip_gen: v7x
topology: tpu7x:2x2x1
jax: 0.10.0
libtpu: 0.0.40
codegen_flags: <defaults>
</compile_context>

<pallas_src>
import numpy as np

import jax
import jax.numpy as jnp
from jax.experimental import pallas as pl
from jax.experimental.pallas import tpu as pltpu

BN_EPS = 1e-5


# ---------------------------------------------------------------------------
# Static operator matrices (host-side numpy, tiny; depend only on shapes/bins)
# ---------------------------------------------------------------------------
def _adaptive_pool_matrix(out_size, in_size):
    """Row i averages input indices [floor(i*in/out), ceil((i+1)*in/out)) — PyTorch adaptive pool."""
    m = np.zeros((out_size, in_size), np.float32)
    for i in range(out_size):
        s = (i * in_size) // out_size
        e = -(-((i + 1) * in_size) // out_size)  # ceil
        m[i, s:e] = 1.0 / (e - s)
    return m


def _bilinear_matrix(out_size, in_size):
    """Row y holds the align_corners=True bilinear weights over the `in_size` source samples."""
    m = np.zeros((out_size, in_size), np.float32)
    if in_size == 1:
        m[:, 0] = 1.0
        return m
    if out_size == 1:
        m[0, 0] = 1.0
        return m
    scale = (in_size - 1) / (out_size - 1)
    for y in range(out_size):
        src = y * scale
        y0 = min(int(np.floor(src)), in_size - 1)
        y1 = min(y0 + 1, in_size - 1)
        w1 = src - y0
        m[y, y0] += 1.0 - w1
        m[y, y1] += w1
    return m


def _build_operators(H, W, bin_sizes):
    """Fused pooling operator (HW, K*bb_max) and stacked upsample operators (K, bb_max, HW).

    Bin k occupies columns [k*bb_max, k*bb_max + b_k^2) of the pooling operator; the remaining
    padding columns are zero.  Upsample rows >= b_k^2 are zero so padded bins contribute nothing.
    """
    bb_max = max(bin_sizes) ** 2
    K = len(bin_sizes)
    HW = H * W
    ppt_cat = np.zeros((HW, K * bb_max), np.float32)
    upt = np.zeros((K, bb_max, HW), np.float32)
    for k, b in enumerate(bin_sizes):
        Py = _adaptive_pool_matrix(b, H)                               # (b, H)
        Px = _adaptive_pool_matrix(b, W)                               # (b, W)
        ppt = np.einsum("ih,jw->hwij", Py, Px).reshape(HW, b * b)      # (HW, bb)
        Uy = _bilinear_matrix(H, b)                                    # (H, b)
        Ux = _bilinear_matrix(W, b)                                    # (W, b)
        up = np.einsum("yi,xj->ijyx", Uy, Ux).reshape(b * b, HW)       # (bb, HW)
        ppt_cat[:, k * bb_max: k * bb_max + b * b] = ppt
        upt[k, : b * b, :] = up
    return ppt_cat, upt, bb_max


# ---------------------------------------------------------------------------
# Pallas kernel: one (image n, Cin-chunk c) grid step computes ALL bins
# ---------------------------------------------------------------------------
def _ppm_kernel(x_ref, ppt_ref, wf_ref, bf_ref, upt_ref, out_ref, acc_ref):
    c = pl.program_id(1)
    K = wf_ref.shape[0]
    bb_max = upt_ref.shape[1]

    @pl.when(c == 0)
    def _():
        acc_ref[...] = jnp.zeros_like(acc_ref)

    # Fused adaptive-average pooling for every bin: one MXU matmul, x in its native (bf16) dtype.
    pooled = jnp.dot(x_ref[...], ppt_ref[...],
                     preferred_element_type=jnp.float32)               # (c_chunk, K*bb_max) f32
    pooled = pooled.astype(wf_ref.dtype)                               # back to compute dtype

    # Per-bin 1x1 conv (with folded BN scale), accumulated over Cin chunks in f32.
    for k in range(K):
        pk = pooled[:, k * bb_max:(k + 1) * bb_max]                    # (c_chunk, bb_max)
        acc_ref[k] += jnp.dot(wf_ref[k], pk, preferred_element_type=jnp.float32)

    @pl.when(c == pl.num_programs(1) - 1)
    def _():
        for k in range(K):
            act = jnp.maximum(acc_ref[k] + bf_ref[k], 0.0)             # folded BN bias + ReLU, f32
            res = jnp.dot(act.astype(upt_ref.dtype), upt_ref[k],
                          preferred_element_type=jnp.float32)          # bilinear upsample (Cout, HW)
            out_ref[k] = res.astype(out_ref.dtype)


# ---------------------------------------------------------------------------
# VMEM-budget-aware Cin chunking
# ---------------------------------------------------------------------------
def _vmem_estimate(c_chunk, HW, K, C_out, bb_max, x_bytes, op_bytes, out_bytes):
    est = 0
    est += 2 * c_chunk * HW * x_bytes               # x chunk (double-buffered)
    est += 2 * HW * K * bb_max * op_bytes           # fused pooling operator
    est += 2 * K * C_out * c_chunk * op_bytes       # folded conv weights
    est += 2 * K * C_out * 128 * 4                  # folded bias (lane-padded)
    est += 2 * K * bb_max * HW * op_bytes           # upsample operators
    est += 2 * K * C_out * HW * out_bytes           # output block
    est += K * C_out * max(bb_max, 128) * 4         # f32 accumulator scratch (lane-padded)
    return est


def _pick_c_chunk(C_in, HW, K, C_out, bb_max, x_bytes, op_bytes, out_bytes, budget):
    # Candidates are the full Cin or 128-aligned divisors (satisfies BlockSpec (8,128)/(16,128)).
    cands = [C_in] + [c for c in (2048, 1024, 512, 256, 128) if c < C_in and C_in % c == 0]
    for cc in cands:
        if _vmem_estimate(cc, HW, K, C_out, bb_max, x_bytes, op_bytes, out_bytes) <= budget:
            return cc
    return cands[-1]


# ---------------------------------------------------------------------------
# Wrapper: forward of PyramidPoolingModule
# ---------------------------------------------------------------------------
def pyramid_pooling_module(x, params, bin_sizes, eps=BN_EPS,
                           compute_dtype=jnp.bfloat16, c_chunk=None,
                           vmem_budget_bytes=36 << 20):
    """x: (N, Cin, H, W); params: per-bin (conv_w (Cout,Cin), gamma, beta, run_mean, run_var)."""
    N, C_in, H, W = x.shape
    K = len(bin_sizes)
    C_out = params[0][0].shape[0]
    HW = H * W

    ppt_np, upt_np, bb_max = _build_operators(H, W, bin_sizes)
    ppt_cat = jnp.asarray(ppt_np).astype(compute_dtype)                # (HW, K*bb_max)
    upt_all = jnp.asarray(upt_np).astype(compute_dtype)                # (K, bb_max, HW)

    # Fold BatchNorm (inference / running stats) into the 1x1 conv weight and a bias.
    wf, bf = [], []
    for (w, gamma, beta, mean, var) in params:
        scale = gamma / jnp.sqrt(var + eps)
        wf.append(w.astype(jnp.float32) * scale[:, None])              # conv weight * BN scale
        bf.append((beta - scale * mean)[:, None])                      # folded BN bias
    wf_all = jnp.stack(wf).astype(compute_dtype)                       # (K, Cout, Cin)
    bf_all = jnp.stack(bf).astype(jnp.float32)                         # (K, Cout, 1), added to f32 acc

    x_bytes = jnp.dtype(compute_dtype).itemsize
    op_bytes = jnp.dtype(compute_dtype).itemsize
    out_bytes = jnp.dtype(x.dtype).itemsize
    if c_chunk is None:
        c_chunk = _pick_c_chunk(C_in, HW, K, C_out, bb_max,
                                x_bytes, op_bytes, out_bytes, vmem_budget_bytes)
    assert C_in % c_chunk == 0, (C_in, c_chunk)
    n_chunks = C_in // c_chunk
    est = _vmem_estimate(c_chunk, HW, K, C_out, bb_max, x_bytes, op_bytes, out_bytes)
    vmem_limit = int(min(max(est + (8 << 20), 16 << 20), 48 << 20))    # stay under v7x 64 MiB/TC

    # Free reshape, no transpose (HW stays lane-dense).  One wrapper-side cast to the bf16 compute
    # dtype so the kernel DMAs half the x bytes and drives the MXU at native bf16 rate (ideally the
    # caller already supplies bf16 activations).
    x_k = x.astype(compute_dtype).reshape(N, C_in, HW)

    res = pl.pallas_call(
        _ppm_kernel,
        out_shape=jax.ShapeDtypeStruct((N, K, C_out, HW), x.dtype),
        grid_spec=pltpu.PrefetchScalarGridSpec(
            num_scalar_prefetch=0,
            grid=(N, n_chunks),                      # x read exactly once; Cin reduction innermost
            in_specs=[
                pl.BlockSpec((None, c_chunk, HW), lambda n, c: (n, c, 0)),       # x chunk
                pl.BlockSpec((HW, K * bb_max), lambda n, c: (0, 0)),             # fused pooling op
                pl.BlockSpec((K, C_out, c_chunk), lambda n, c: (0, 0, c)),       # folded conv weights
                pl.BlockSpec((K, C_out, 1), lambda n, c: (0, 0, 0)),             # folded BN bias
                pl.BlockSpec((K, bb_max, HW), lambda n, c: (0, 0, 0)),           # upsample ops
            ],
            out_specs=pl.BlockSpec((None, K, C_out, HW), lambda n, c: (n, 0, 0, 0)),
            scratch_shapes=[pltpu.VMEM((K, C_out, bb_max), jnp.float32)],
        ),
        compiler_params=pltpu.CompilerParams(
            dimension_semantics=("parallel", "arbitrary"),
            vmem_limit_bytes=vmem_limit),
    )(x_k, ppt_cat, wf_all, bf_all, upt_all)

    res = res.reshape(N, K * C_out, H, W)
    # TODO(synk): the concat is a pure copy left to XLA; a zero-copy variant would pre-allocate
    #             (N, Cin+K*Cout, H, W) and alias the kernel output into the tail channels.
    return jnp.concatenate([x, res], axis=1)                           # torch.cat(out, 1)


# ---------------------------------------------------------------------------
# Pure-JAX reference (direct pooling / gather-based bilinear), for sanity check
# ---------------------------------------------------------------------------
def _adaptive_avg_pool_ref(x, b):
    N, C, H, W = x.shape
    rows = []
    for i in range(b):
        hs, he = (i * H) // b, -(-((i + 1) * H) // b)
        cols = []
        for j in range(b):
            ws, we = (j * W) // b, -(-((j + 1) * W) // b)
            cols.append(jnp.mean(x[:, :, hs:he, ws:we], axis=(2, 3)))
        rows.append(jnp.stack(cols, axis=-1))
    return jnp.stack(rows, axis=-2)                                    # (N, C, b, b)


def _bilinear_upsample_ref(x, H, W):
    N, C, h, w = x.shape
    ys = jnp.arange(H, dtype=jnp.float32) * (0.0 if h == 1 else (h - 1) / (H - 1))
    xs = jnp.arange(W, dtype=jnp.float32) * (0.0 if w == 1 else (w - 1) / (W - 1))
    y0 = jnp.clip(jnp.floor(ys).astype(jnp.int32), 0, h - 1)
    x0 = jnp.clip(jnp.floor(xs).astype(jnp.int32), 0, w - 1)
    y1 = jnp.minimum(y0 + 1, h - 1)
    x1 = jnp.minimum(x0 + 1, w - 1)
    wy = (ys - y0.astype(jnp.float32))[None, None, :, None]
    wx = (xs - x0.astype(jnp.float32))[None, None, None, :]
    g = lambda yi, xi: x[:, :, yi, :][:, :, :, xi]
    top = g(y0, x0) * (1 - wx) + g(y0, x1) * wx
    bot = g(y1, x0) * (1 - wx) + g(y1, x1) * wx
    return top * (1 - wy) + bot * wy


def reference_ppm(x, params, bin_sizes, eps=BN_EPS):
    N, C, H, W = x.shape
    outs = [x]
    for (w, gamma, beta, mean, var), b in zip(params, bin_sizes):
        pooled = _adaptive_avg_pool_ref(x, b)
        conv = jnp.einsum("oc,ncij->noij", w, pooled)
        inv = gamma / jnp.sqrt(var + eps)
        bn = conv * inv[None, :, None, None] + (beta - inv * mean)[None, :, None, None]
        act = jnp.maximum(bn, 0.0)
        outs.append(_bilinear_upsample_ref(act, H, W))
    return jnp.concatenate(outs, axis=1)


# ---------------------------------------------------------------------------
def init_ppm_params(key, in_channels, out_channels, bin_sizes):
    params = []
    for i in range(len(bin_sizes)):
        k0, k1, k2, k3, k4 = jax.random.split(jax.random.fold_in(key, i), 5)
        w = jax.random.normal(k0, (out_channels, in_channels), jnp.float32) / np.sqrt(in_channels)
        gamma = jax.random.uniform(k1, (out_channels,), jnp.float32, 0.5, 1.5)
        beta = 0.1 * jax.random.normal(k2, (out_channels,), jnp.float32)
        mean = 0.1 * jax.random.normal(k3, (out_channels,), jnp.float32)
        var = jax.random.uniform(k4, (out_channels,), jnp.float32, 0.5, 1.5)
        params.append((w, gamma, beta, mean, var))
    return params


if __name__ == "__main__":
    key = jax.random.PRNGKey(0)
    kx, kp = jax.random.split(key)

    N, C_in, H, W = 2, 32, 16, 16
    C_out = 16
    bin_sizes = (1, 2, 3, 6)

    x = jax.random.normal(kx, (N, C_in, H, W), jnp.float32)
    params = init_ppm_params(kp, C_in, C_out, bin_sizes)

    ref = jax.block_until_ready(reference_ppm(x, params, bin_sizes))
    expected_shape = (N, C_in + len(bin_sizes) * C_out, H, W)

    # Default bf16 compute path (the fast path: bf16 x / operators, f32 accumulation).
    out_bf16 = jax.block_until_ready(pyramid_pooling_module(x, params, bin_sizes))
    assert out_bf16.shape == expected_shape, out_bf16.shape
    err_bf16 = float(jnp.max(jnp.abs(out_bf16 - ref)))
    assert jnp.allclose(out_bf16, ref, rtol=2e-2, atol=2.5e-2), err_bf16

    # Full-precision path (everything f32 end-to-end).
    out_f32 = jax.block_until_ready(
        pyramid_pooling_module(x, params, bin_sizes, compute_dtype=jnp.float32))
    assert out_f32.shape == expected_shape, out_f32.shape
    err_f32 = float(jnp.max(jnp.abs(out_f32 - ref)))
    assert jnp.allclose(out_f32, ref, rtol=5e-3, atol=5e-3), err_f32

    print("KERNEL_OK")
</pallas_src>

<mosaic_0001>
module attributes {stable_mosaic.version = 11 : i64} {
  func.func @_ppm_kernel(%arg0: i32, %arg1: i32, %arg2: memref<1x32x256xbf16, #tpu.memory_space<vmem>>, %arg3: memref<256x144xbf16, #tpu.memory_space<vmem>>, %arg4: memref<4x16x32xbf16, #tpu.memory_space<vmem>>, %arg5: memref<4x16x1xf32, #tpu.memory_space<vmem>>, %arg6: memref<4x36x256xbf16, #tpu.memory_space<vmem>>, %arg7: memref<1x4x16x256xf32, #tpu.memory_space<vmem>>, %arg8: memref<4x16x36xf32, #tpu.memory_space<vmem>>) attributes {dimension_semantics = [#tpu.dimension_semantics<parallel>, #tpu.dimension_semantics<arbitrary>], iteration_bounds = array<i64: 2, 1>, scalar_prefetch = 0 : i64, scratch_operands = 1 : i64, tpu.core_type = #tpu.core_type<tc>, window_params = [{transform_indices = @transform_0, window_bounds = array<i64: 1, 32, 256>}, {pipeline_mode = #tpu.pipeline_mode<synchronous>, transform_indices = @transform_1, window_bounds = array<i64: 256, 144>}, {transform_indices = @transform_2, window_bounds = array<i64: 4, 16, 32>}, {pipeline_mode = #tpu.pipeline_mode<synchronous>, transform_indices = @transform_3, window_bounds = array<i64: 4, 16, 1>}, {pipeline_mode = #tpu.pipeline_mode<synchronous>, transform_indices = @transform_4, window_bounds = array<i64: 4, 36, 256>}, {transform_indices = @transform_5, window_bounds = array<i64: 1, 4, 16, 256>}]} {
    %c0_i32 = arith.constant 0 : i32
    %0 = arith.cmpi eq, %arg1, %c0_i32 : i32
    %1 = arith.extui %0 : i1 to i32
    %c0_i32_0 = arith.constant 0 : i32
    %2 = arith.cmpi ne, %1, %c0_i32_0 : i32
    scf.if %2 {
      %cst_44 = arith.constant 0.000000e+00 : f32
      %51 = vector.broadcast %cst_44 : f32 to vector<4x16x36xf32>
      %c0_45 = arith.constant 0 : index
      %c0_46 = arith.constant 0 : index
      %c0_47 = arith.constant 0 : index
      %52 = vector.load %arg8[%c0_45, %c0_46, %c0_47] : memref<4x16x36xf32, #tpu.memory_space<vmem>>, vector<4x16x36xf32>
      tpu.vector_store %arg8[%c0_45, %c0_46, %c0_47], %51 {strides = array<i32>} : memref<4x16x36xf32, #tpu.memory_space<vmem>>, vector<4x16x36xf32>,
    } else {
    }
    %c0 = arith.constant 0 : index
    %c0_1 = arith.constant 0 : index
    %c0_2 = arith.constant 0 : index
    %3 = vector.load %arg2[%c0, %c0_1, %c0_2] : memref<1x32x256xbf16, #tpu.memory_space<vmem>>, vector<1x32x256xbf16>
    %4 = vector.shape_cast %3 : vector<1x32x256xbf16> to vector<32x256xbf16>
    %c0_3 = arith.constant 0 : index
    %c0_4 = arith.constant 0 : index
    %5 = vector.load %arg3[%c0_3, %c0_4] : memref<256x144xbf16, #tpu.memory_space<vmem>>, vector<256x144xbf16>
    %cst = arith.constant dense<0.000000e+00> : vector<32x144xf32>
    %6 = tpu.matmul %4, %5, %cst {dimension_numbers = #tpu.dot_dimension_numbers<[1], [0], [0], [1], [0, 0, 1, 1], [], []>} : vector<32x256xbf16>, vector<256x144xbf16>, vector<32x144xf32> -> vector<32x144xf32>
    %7 = arith.truncf %6 : vector<32x144xf32> to vector<32x144xbf16>
    %8 = vector.extract_strided_slice %7 {offsets = [0, 0], sizes = [32, 36], strides = [1, 1]} : vector<32x144xbf16> to vector<32x36xbf16>
    %c0_5 = arith.constant 0 : index
    %c0_6 = arith.constant 0 : index
    %c0_7 = arith.constant 0 : index
    %9 = vector.load %arg8[%c0_5, %c0_6, %c0_7] : memref<4x16x36xf32, #tpu.memory_space<vmem>>, vector<1x16x36xf32>
    %10 = vector.shape_cast %9 : vector<1x16x36xf32> to vector<16x36xf32>
    %c0_8 = arith.constant 0 : index
    %c0_9 = arith.constant 0 : index
    %c0_10 = arith.constant 0 : index
    %11 = vector.load %arg4[%c0_8, %c0_9, %c0_10] : memref<4x16x32xbf16, #tpu.memory_space<vmem>>, vector<1x16x32xbf16>
    %12 = vector.shape_cast %11 : vector<1x16x32xbf16> to vector<16x32xbf16>
    %cst_11 = arith.constant dense<0.000000e+00> : vector<16x36xf32>
    %13 = tpu.matmul %12, %8, %cst_11 {dimension_numbers = #tpu.dot_dimension_numbers<[1], [0], [0], [1], [0, 0, 1, 1], [], []>} : vector<16x32xbf16>, vector<32x36xbf16>, vector<16x36xf32> -> vector<16x36xf32>
    %14 = arith.addf %10, %13 : vector<16x36xf32>
    %c0_12 = arith.constant 0 : index
    %c0_13 = arith.constant 0 : index
    %c0_14 = arith.constant 0 : index
    %15 = vector.load %arg8[%c0_12, %c0_13, %c0_14] : memref<4x16x36xf32, #tpu.memory_space<vmem>>, vector<1x16x36xf32>
    %16 = vector.shape_cast %15 : vector<1x16x36xf32> to vector<16x36xf32>
    %17 = vector.shape_cast %14 : vector<16x36xf32> to vector<1x16x36xf32>
    tpu.vector_store %arg8[%c0_12, %c0_13, %c0_14], %17 {strides = array<i32>} : memref<4x16x36xf32, #tpu.memory_space<vmem>>, vector<1x16x36xf32>,
    %18 = vector.extract_strided_slice %7 {offsets = [0, 36], sizes = [32, 36], strides = [1, 1]} : vector<32x144xbf16> to vector<32x36xbf16>
    %c1 = arith.constant 1 : index
    %c0_15 = arith.constant 0 : index
    %c0_16 = arith.constant 0 : index
    %19 = vector.load %arg8[%c1, %c0_15, %c0_16] : memref<4x16x36xf32, #tpu.memory_space<vmem>>, vector<1x16x36xf32>
    %20 = vector.shape_cast %19 : vector<1x16x36xf32> to vector<16x36xf32>
    %c1_17 = arith.constant 1 : index
    %c0_18 = arith.constant 0 : index
    %c0_19 = arith.constant 0 : index
    %21 = vector.load %arg4[%c1_17, %c0_18, %c0_19] : memref<4x16x32xbf16, #tpu.memory_space<vmem>>, vector<1x16x32xbf16>
    %22 = vector.shape_cast %21 : vector<1x16x32xbf16> to vector<16x32xbf16>
    %cst_20 = arith.constant dense<0.000000e+00> : vector<16x36xf32>
    %23 = tpu.matmul %22, %18, %cst_20 {dimension_numbers = #tpu.dot_dimension_numbers<[1], [0], [0], [1], [0, 0, 1, 1], [], []>} : vector<16x32xbf16>, vector<32x36xbf16>, vector<16x36xf32> -> vector<16x36xf32>
    %24 = arith.addf %20, %23 : vector<16x36xf32>
    %c1_21 = arith.constant 1 : index
    %c0_22 = arith.constant 0 : index
    %c0_23 = arith.constant 0 : index
    %25 = vector.load %arg8[%c1_21, %c0_22, %c0_23] : memref<4x16x36xf32, #tpu.memory_space<vmem>>, vector<1x16x36xf32>
    %26 = vector.shape_cast %25 : vector<1x16x36xf32> to vector<16x36xf32>
    %27 = vector.shape_cast %24 : vector<16x36xf32> to vector<1x16x36xf32>
    tpu.vector_store %arg8[%c1_21, %c0_22, %c0_23], %27 {strides = array<i32>} : memref<4x16x36xf32, #tpu.memory_space<vmem>>, vector<1x16x36xf32>,
    %28 = vector.extract_strided_slice %7 {offsets = [0, 72], sizes = [32, 36], strides = [1, 1]} : vector<32x144xbf16> to vector<32x36xbf16>
    %c2 = arith.constant 2 : index
    %c0_24 = arith.constant 0 : index
    %c0_25 = arith.constant 0 : index
    %29 = vector.load %arg8[%c2, %c0_24, %c0_25] : memref<4x16x36xf32, #tpu.memory_space<vmem>>, vector<1x16x36xf32>
    %30 = vector.shape_cast %29 : vector<1x16x36xf32> to vector<16x36xf32>
    %c2_26 = arith.constant 2 : index
    %c0_27 = arith.constant 0 : index
    %c0_28 = arith.constant 0 : index
    %31 = vector.load %arg4[%c2_26, %c0_27, %c0_28] : memref<4x16x32xbf16, #tpu.memory_space<vmem>>, vector<1x16x32xbf16>
    %32 = vector.shape_cast %31 : vector<1x16x32xbf16> to vector<16x32xbf16>
    %cst_29 = arith.constant dense<0.000000e+00> : vector<16x36xf32>
    %33 = tpu.matmul %32, %28, %cst_29 {dimension_numbers = #tpu.dot_dimension_numbers<[1], [0], [0], [1], [0, 0, 1, 1], [], []>} : vector<16x32xbf16>, vector<32x36xbf16>, vector<16x36xf32> -> vector<16x36xf32>
    %34 = arith.addf %30, %33 : vector<16x36xf32>
    %c2_30 = arith.constant 2 : index
    %c0_31 = arith.constant 0 : index
    %c0_32 = arith.constant 0 : index
    %35 = vector.load %arg8[%c2_30, %c0_31, %c0_32] : memref<4x16x36xf32, #tpu.memory_space<vmem>>, vector<1x16x36xf32>
    %36 = vector.shape_cast %35 : vector<1x16x36xf32> to vector<16x36xf32>
    %37 = vector.shape_cast %34 : vector<16x36xf32> to vector<1x16x36xf32>
    tpu.vector_store %arg8[%c2_30, %c0_31, %c0_32], %37 {strides = array<i32>} : memref<4x16x36xf32, #tpu.memory_space<vmem>>, vector<1x16x36xf32>,
    %38 = vector.extract_strided_slice %7 {offsets = [0, 108], sizes = [32, 36], strides = [1, 1]} : vector<32x144xbf16> to vector<32x36xbf16>
    %c3 = arith.constant 3 : index
    %c0_33 = arith.constant 0 : index
    %c0_34 = arith.constant 0 : index
    %39 = vector.load %arg8[%c3, %c0_33, %c0_34] : memref<4x16x36xf32, #tpu.memory_space<vmem>>, vector<1x16x36xf32>
    %40 = vector.shape_cast %39 : vector<1x16x36xf32> to vector<16x36xf32>
    %c3_35 = arith.constant 3 : index
    %c0_36 = arith.constant 0 : index
    %c0_37 = arith.constant 0 : index
    %41 = vector.load %arg4[%c3_35, %c0_36, %c0_37] : memref<4x16x32xbf16, #tpu.memory_space<vmem>>, vector<1x16x32xbf16>
    %42 = vector.shape_cast %41 : vector<1x16x32xbf16> to vector<16x32xbf16>
    %cst_38 = arith.constant dense<0.000000e+00> : vector<16x36xf32>
    %43 = tpu.matmul %42, %38, %cst_38 {dimension_numbers = #tpu.dot_dimension_numbers<[1], [0], [0], [1], [0, 0, 1, 1], [], []>} : vector<16x32xbf16>, vector<32x36xbf16>, vector<16x36xf32> -> vector<16x36xf32>
    %44 = arith.addf %40, %43 : vector<16x36xf32>
    %c3_39 = arith.constant 3 : index
    %c0_40 = arith.constant 0 : index
    %c0_41 = arith.constant 0 : index
    %45 = vector.load %arg8[%c3_39, %c0_40, %c0_41] : memref<4x16x36xf32, #tpu.memory_space<vmem>>, vector<1x16x36xf32>
    %46 = vector.shape_cast %45 : vector<1x16x36xf32> to vector<16x36xf32>
    %47 = vector.shape_cast %44 : vector<16x36xf32> to vector<1x16x36xf32>
    tpu.vector_store %arg8[%c3_39, %c0_40, %c0_41], %47 {strides = array<i32>} : memref<4x16x36xf32, #tpu.memory_space<vmem>>, vector<1x16x36xf32>,
    %c0_i32_42 = arith.constant 0 : i32
    %48 = arith.cmpi eq, %arg1, %c0_i32_42 : i32
    %49 = arith.extui %48 : i1 to i32
    %c0_i32_43 = arith.constant 0 : i32
    %50 = arith.cmpi ne, %49, %c0_i32_43 : i32
    scf.if %50 {
      %c0_44 = arith.constant 0 : index
      %c0_45 = arith.constant 0 : index
      %c0_46 = arith.constant 0 : index
      %51 = vector.load %arg8[%c0_44, %c0_45, %c0_46] : memref<4x16x36xf32, #tpu.memory_space<vmem>>, vector<1x16x36xf32>
      %52 = vector.shape_cast %51 : vector<1x16x36xf32> to vector<16x36xf32>
      %c0_47 = arith.constant 0 : index
      %c0_48 = arith.constant 0 : index
      %c0_49 = arith.constant 0 : index
      %53 = vector.load %arg5[%c0_47, %c0_48, %c0_49] : memref<4x16x1xf32, #tpu.memory_space<vmem>>, vector<1x16x1xf32>
      %54 = vector.shape_cast %53 : vector<1x16x1xf32> to vector<16x1xf32>
      %55 = vector.broadcast %54 : vector<16x1xf32> to vector<16x36xf32>
      %56 = arith.addf %52, %55 : vector<16x36xf32>
      %cst_50 = arith.constant 0.000000e+00 : f32
      %57 = vector.broadcast %cst_50 : f32 to vector<16x36xf32>
      %58 = arith.maximumf %56, %57 : vector<16x36xf32>
      %59 = arith.truncf %58 : vector<16x36xf32> to vector<16x36xbf16>
      %c0_51 = arith.constant 0 : index
      %c0_52 = arith.constant 0 : index
      %c0_53 = arith.constant 0 : index
      %60 = vector.load %arg6[%c0_51, %c0_52, %c0_53] : memref<4x36x256xbf16, #tpu.memory_space<vmem>>, vector<1x36x256xbf16>
      %61 = vector.shape_cast %60 : vector<1x36x256xbf16> to vector<36x256xbf16>
      %cst_54 = arith.constant dense<0.000000e+00> : vector<16x256xf32>
      %62 = tpu.matmul %59, %61, %cst_54 {dimension_numbers = #tpu.dot_dimension_numbers<[1], [0], [0], [1], [0, 0, 1, 1], [], []>} : vector<16x36xbf16>, vector<36x256xbf16>, vector<16x256xf32> -> vector<16x256xf32>
      %c0_55 = arith.constant 0 : index
      %c0_56 = arith.constant 0 : index
      %c0_57 = arith.constant 0 : index
      %c0_58 = arith.constant 0 : index
      %63 = vector.load %arg7[%c0_55, %c0_56, %c0_57, %c0_58] : memref<1x4x16x256xf32, #tpu.memory_space<vmem>>, vector<1x1x16x256xf32>
      %64 = vector.shape_cast %63 : vector<1x1x16x256xf32> to vector<16x256xf32>
      %65 = vector.shape_cast %62 : vector<16x256xf32> to vector<1x1x16x256xf32>
      tpu.vector_store %arg7[%c0_55, %c0_56, %c0_57, %c0_58], %65 {strides = array<i32>} : memref<1x4x16x256xf32, #tpu.memory_space<vmem>>, vector<1x1x16x256xf32>,
      %c1_59 = arith.constant 1 : index
      %c0_60 = arith.constant 0 : index
      %c0_61 = arith.constant 0 : index
      %66 = vector.load %arg8[%c1_59, %c0_60, %c0_61] : memref<4x16x36xf32, #tpu.memory_space<vmem>>, vector<1x16x36xf32>
      %67 = vector.shape_cast %66 : vector<1x16x36xf32> to vector<16x36xf32>
      %c1_62 = arith.constant 1 : index
      %c0_63 = arith.constant 0 : index
      %c0_64 = arith.constant 0 : index
      %68 = vector.load %arg5[%c1_62, %c0_63, %c0_64] : memref<4x16x1xf32, #tpu.memory_space<vmem>>, vector<1x16x1xf32>
      %69 = vector.shape_cast %68 : vector<1x16x1xf32> to vector<16x1xf32>
      %70 = vector.broadcast %69 : vector<16x1xf32> to vector<16x36xf32>
      %71 = arith.addf %67, %70 : vector<16x36xf32>
      %cst_65 = arith.constant 0.000000e+00 : f32
      %72 = vector.broadcast %cst_65 : f32 to vector<16x36xf32>
      %73 = arith.maximumf %71, %72 : vector<16x36xf32>
      %74 = arith.truncf %73 : vector<16x36xf32> to vector<16x36xbf16>
      %c1_66 = arith.constant 1 : index
      %c0_67 = arith.constant 0 : index
      %c0_68 = arith.constant 0 : index
      %75 = vector.load %arg6[%c1_66, %c0_67, %c0_68] : memref<4x36x256xbf16, #tpu.memory_space<vmem>>, vector<1x36x256xbf16>
      %76 = vector.shape_cast %75 : vector<1x36x256xbf16> to vector<36x256xbf16>
      %cst_69 = arith.constant dense<0.000000e+00> : vector<16x256xf32>
      %77 = tpu.matmul %74, %76, %cst_69 {dimension_numbers = #tpu.dot_dimension_numbers<[1], [0], [0], [1], [0, 0, 1, 1], [], []>} : vector<16x36xbf16>, vector<36x256xbf16>, vector<16x256xf32> -> vector<16x256xf32>
      %c0_70 = arith.constant 0 : index
      %c1_71 = arith.constant 1 : index
      %c0_72 = arith.constant 0 : index
      %c0_73 = arith.constant 0 : index
      %78 = vector.load %arg7[%c0_70, %c1_71, %c0_72, %c0_73] : memref<1x4x16x256xf32, #tpu.memory_space<vmem>>, vector<1x1x16x256xf32>
      %79 = vector.shape_cast %78 : vector<1x1x16x256xf32> to vector<16x256xf32>
      %80 = vector.shape_cast %77 : vector<16x256xf32> to vector<1x1x16x256xf32>
      tpu.vector_store %arg7[%c0_70, %c1_71, %c0_72, %c0_73], %80 {strides = array<i32>} : memref<1x4x16x256xf32, #tpu.memory_space<vmem>>, vector<1x1x16x256xf32>,
      %c2_74 = arith.constant 2 : index
      %c0_75 = arith.constant 0 : index
      %c0_76 = arith.constant 0 : index
      %81 = vector.load %arg8[%c2_74, %c0_75, %c0_76] : memref<4x16x36xf32, #tpu.memory_space<vmem>>, vector<1x16x36xf32>
      %82 = vector.shape_cast %81 : vector<1x16x36xf32> to vector<16x36xf32>
      %c2_77 = arith.constant 2 : index
      %c0_78 = arith.constant 0 : index
      %c0_79 = arith.constant 0 : index
      %83 = vector.load %arg5[%c2_77, %c0_78, %c0_79] : memref<4x16x1xf32, #tpu.memory_space<vmem>>, vector<1x16x1xf32>
      %84 = vector.shape_cast %83 : vector<1x16x1xf32> to vector<16x1xf32>
      %85 = vector.broadcast %84 : vector<16x1xf32> to vector<16x36xf32>
      %86 = arith.addf %82, %85 : vector<16x36xf32>
      %cst_80 = arith.constant 0.000000e+00 : f32
      %87 = vector.broadcast %cst_80 : f32 to vector<16x36xf32>
      %88 = arith.maximumf %86, %87 : vector<16x36xf32>
      %89 = arith.truncf %88 : vector<16x36xf32> to vector<16x36xbf16>
      %c2_81 = arith.constant 2 : index
      %c0_82 = arith.constant 0 : index
      %c0_83 = arith.constant 0 : index
      %90 = vector.load %arg6[%c2_81, %c0_82, %c0_83] : memref<4x36x256xbf16, #tpu.memory_space<vmem>>, vector<1x36x256xbf16>
      %91 = vector.shape_cast %90 : vector<1x36x256xbf16> to vector<36x256xbf16>
      %cst_84 = arith.constant dense<0.000000e+00> : vector<16x256xf32>
      %92 = tpu.matmul %89, %91, %cst_84 {dimension_numbers = #tpu.dot_dimension_numbers<[1], [0], [0], [1], [0, 0, 1, 1], [], []>} : vector<16x36xbf16>, vector<36x256xbf16>, vector<16x256xf32> -> vector<16x256xf32>
      %c0_85 = arith.constant 0 : index
      %c2_86 = arith.constant 2 : index
      %c0_87 = arith.constant 0 : index
      %c0_88 = arith.constant 0 : index
      %93 = vector.load %arg7[%c0_85, %c2_86, %c0_87, %c0_88] : memref<1x4x16x256xf32, #tpu.memory_space<vmem>>, vector<1x1x16x256xf32>
      %94 = vector.shape_cast %93 : vector<1x1x16x256xf32> to vector<16x256xf32>
      %95 = vector.shape_cast %92 : vector<16x256xf32> to vector<1x1x16x256xf32>
      tpu.vector_store %arg7[%c0_85, %c2_86, %c0_87, %c0_88], %95 {strides = array<i32>} : memref<1x4x16x256xf32, #tpu.memory_space<vmem>>, vector<1x1x16x256xf32>,
      %c3_89 = arith.constant 3 : index
      %c0_90 = arith.constant 0 : index
      %c0_91 = arith.constant 0 : index
      %96 = vector.load %arg8[%c3_89, %c0_90, %c0_91] : memref<4x16x36xf32, #tpu.memory_space<vmem>>, vector<1x16x36xf32>
      %97 = vector.shape_cast %96 : vector<1x16x36xf32> to vector<16x36xf32>
      %c3_92 = arith.constant 3 : index
      %c0_93 = arith.constant 0 : index
      %c0_94 = arith.constant 0 : index
      %98 = vector.load %arg5[%c3_92, %c0_93, %c0_94] : memref<4x16x1xf32, #tpu.memory_space<vmem>>, vector<1x16x1xf32>
      %99 = vector.shape_cast %98 : vector<1x16x1xf32> to vector<16x1xf32>
      %100 = vector.broadcast %99 : vector<16x1xf32> to vector<16x36xf32>
      %101 = arith.addf %97, %100 : vector<16x36xf32>
      %cst_95 = arith.constant 0.000000e+00 : f32
      %102 = vector.broadcast %cst_95 : f32 to vector<16x36xf32>
      %103 = arith.maximumf %101, %102 : vector<16x36xf32>
      %104 = arith.truncf %103 : vector<16x36xf32> to vector<16x36xbf16>
      %c3_96 = arith.constant 3 : index
      %c0_97 = arith.constant 0 : index
      %c0_98 = arith.constant 0 : index
      %105 = vector.load %arg6[%c3_96, %c0_97, %c0_98] : memref<4x36x256xbf16, #tpu.memory_space<vmem>>, vector<1x36x256xbf16>
      %106 = vector.shape_cast %105 : vector<1x36x256xbf16> to vector<36x256xbf16>
      %cst_99 = arith.constant dense<0.000000e+00> : vector<16x256xf32>
      %107 = tpu.matmul %104, %106, %cst_99 {dimension_numbers = #tpu.dot_dimension_numbers<[1], [0], [0], [1], [0, 0, 1, 1], [], []>} : vector<16x36xbf16>, vector<36x256xbf16>, vector<16x256xf32> -> vector<16x256xf32>
      %c0_100 = arith.constant 0 : index
      %c3_101 = arith.constant 3 : index
      %c0_102 = arith.constant 0 : index
      %c0_103 = arith.constant 0 : index
      %108 = vector.load %arg7[%c0_100, %c3_101, %c0_102, %c0_103] : memref<1x4x16x256xf32, #tpu.memory_space<vmem>>, vector<1x1x16x256xf32>
      %109 = vector.shape_cast %108 : vector<1x1x16x256xf32> to vector<16x256xf32>
      %110 = vector.shape_cast %107 : vector<16x256xf32> to vector<1x1x16x256xf32>
      tpu.vector_store %arg7[%c0_100, %c3_101, %c0_102, %c0_103], %110 {strides = array<i32>} : memref<1x4x16x256xf32, #tpu.memory_space<vmem>>, vector<1x1x16x256xf32>,
    } else {
    }
    return
  }
  func.func @transform_0(%arg0: i32, %arg1: i32) -> (i32, i32, i32) {
    %c0_i32 = arith.constant 0 : i32
    %c0_i32_0 = arith.constant 0 : i32
    return %arg0, %arg1, %c0_i32 : i32, i32, i32
  }
  func.func @transform_1(%arg0: i32, %arg1: i32) -> (i32, i32) {
    %c0_i32 = arith.constant 0 : i32
    %c0_i32_0 = arith.constant 0 : i32
    %c0_i32_1 = arith.constant 0 : i32
    return %c0_i32, %c0_i32_0 : i32, i32
  }
  func.func @transform_2(%arg0: i32, %arg1: i32) -> (i32, i32, i32) {
    %c0_i32 = arith.constant 0 : i32
    %c0_i32_0 = arith.constant 0 : i32
    %c0_i32_1 = arith.constant 0 : i32
    return %c0_i32, %c0_i32_0, %arg1 : i32, i32, i32
  }
  func.func @transform_3(%arg0: i32, %arg1: i32) -> (i32, i32, i32) {
    %c0_i32 = arith.constant 0 : i32
    %c0_i32_0 = arith.constant 0 : i32
    %c0_i32_1 = arith.constant 0 : i32
    %c0_i32_2 = arith.constant 0 : i32
    return %c0_i32, %c0_i32_0, %c0_i32_1 : i32, i32, i32
  }
  func.func @transform_4(%arg0: i32, %arg1: i32) -> (i32, i32, i32) {
    %c0_i32 = arith.constant 0 : i32
    %c0_i32_0 = arith.constant 0 : i32
    %c0_i32_1 = arith.constant 0 : i32
    %c0_i32_2 = arith.constant 0 : i32
    return %c0_i32, %c0_i32_0, %c0_i32_1 : i32, i32, i32
  }
  func.func @transform_5(%arg0: i32, %arg1: i32) -> (i32, i32, i32, i32) {
    %c0_i32 = arith.constant 0 : i32
    %c0_i32_0 = arith.constant 0 : i32
    %c0_i32_1 = arith.constant 0 : i32
    %c0_i32_2 = arith.constant 0 : i32
    return %arg0, %c0_i32, %c0_i32_0, %c0_i32_1 : i32, i32, i32, i32
  }
}

</mosaic_0001>

<llo_original>
// kernel: tpu_custom_call.1
$region0: #{tpu_custom_call.1}
  #allocation0 [shape = 'u32[]', space=smem, size = 0x4, offset = 0x4, fixed_abs, tag = 'smem constant byte address 0x4 - core index']
  #allocation1 [shape = 'u32[144,128]{1,0:T(1,128)}', space=vmem, size = 0x12000, scoped, tag = 'internal scratch']
  #allocation2 [shape = 'f32[4,16,36]{2,1,0:T(8,128)}', space=vmem, size = 0x8000, scoped, tag = 'scratch operand']
  %s0 = inlined_call_operand.vmem [shape: bf16[2,32,256], index: 0, kind: input, shape index: {}]
  %s1 = inlined_call_operand.vmem [shape: bf16[256,144], index: 1, kind: input, shape index: {}]
  %s2 = inlined_call_operand.vmem [shape: bf16[4,16,32], index: 2, kind: input, shape index: {}]
  %s3 = inlined_call_operand.vmem [shape: f32[4,16,1], index: 3, kind: input, shape index: {}]
  %s4 = inlined_call_operand.vmem [shape: bf16[4,36,256], index: 4, kind: input, shape index: {}]
  %s5 = inlined_call_operand.hbm [shape: f32[2,4,16,256], index: 5, kind: output, shape index: {}]
  %s6 = sld [smem:[#allocation0]]
  $region61: #{tpu_custom_call.1} parent=0
    _
  %s8 = ssub.s32 1, %s6
  %s9 = scalar_select 0, %s8, %s6
  $region1: #{tpu_custom_call.1} parent=0
    #allocation3 [shape = 'u8[131072]{0}', space=vmem, size = 0x20000, scoped, tag = 'output window, operand 0']
    #allocation4 [shape = 's32[2]{0}', space=sflag, size = 0x8, scoped, tag = 'scoped memory for tpu_custom_call.1']
    %10 = vsyncpa [#allocation4], 0
    %s11 = scalar_lea.sflag [#allocation4], 1
    %12 = vsyncpa %s11, 0
    loop: start=0, step=1, limit=4
    $region2: #{tpu_custom_call.1} parent=1 // loop_pre_header
      _
    $region3: #{tpu_custom_call.1} parent=1 // loop_header
      %s14 = sphi 0, %s18
      %p15 = scmp.ge.s32.totalorder %s14, 4
      %s21 = sphi 0, %s33
      %s22 = sphi 0, %s29
      %s23 = sphi 0, %s21
      %s24 = sphi 0, %s22
      %s25 = sphi 0, %s23
      %s26 = sphi 0, %s24
      %s38 = sphi 0, %s40
      %s41 = sphi 0, %s38
      %s42 = sphi 0, %s41
      %s58 = sphi 0, %s42
      %s62 = sphi 0, %s62
      %s64 = sphi 0, %s62
      %s65 = sphi 0, %s64
      %s79 = sphi 0, %s65
      %s85 = sphi 0, %s87
      %s88 = sphi 0, %s85
      %s89 = sphi 0, %s88
      %s105 = sphi 0, %s89
      %s109 = sphi 0, %s109
      %s111 = sphi 0, %s109
      %s112 = sphi 0, %s111
      %s126 = sphi 0, %s112
      %s130 = sphi 0, %s130
      %s132 = sphi 0, %s130
      %s133 = sphi 0, %s132
      %s147 = sphi 0, %s133
      %s153 = sphi 0, %s155
      %s156 = sphi 0, %s153
      %s157 = sphi 0, %s156
      %s173 = sphi 0, %s157
    $region4: #{tpu_custom_call.1} parent=1 // loop_header_branch
      %17 = sbr.rel (%p15) target = $region8
    $region5: #{tpu_custom_call.1} parent=1 // loop_body
      %s19 = ssub.s32 %s14, 1
      %s20 = ssub.s32 %s14, 2
      %s27 = sadd.s32 1, %s22
      %p28 = scmp.ge.s32.totalorder %s27, 1
      %s29 = scalar_select %p28, 0, %s27
      %s30 = sadd.s32 1, %s21
      %s31 = scalar_select %p28, %s30, %s21
      %p32 = scmp.ge.s32.totalorder %s31, 2
      %s33 = scalar_select %p32, 0, %s31
      %s34 = ssub.s32 %s21, %s33
      %s35 = ssub.s32 %s22, %s29
      %s36 = sor.u32 %s34, %s35
      %p37 = scmp.eq.s32.totalorder %s36, 0
      %s39 = sadd.s32 %s38, 1
      %s40 = scalar_select %p37, %s38, %s39
      %p43 = pneg %p37
      %p44 = scmp.eq.s32.totalorder %s14, 1
      %p45 = por %p43, %p44
      %p46 = scmp.ne.s32.totalorder %s38, %s41
      %p47 = scmp.eq.s32.totalorder %s14, 0
      %p48 = por %p46, %p47
      %p49 = scmp.ne.s32.totalorder %s38, %s41
      %p50 = scmp.eq.s32.totalorder %s19, 1
      %p51 = por %p49, %p50
      %p52 = scmp.ne.s32.totalorder %s41, %s42
      %p53 = scmp.eq.s32.totalorder %s19, 0
      %p54 = por %p52, %p53
      %p55 = scmp.ne.s32.totalorder %s41, %s42
      %p56 = scmp.eq.s32.totalorder %s20, 1
      %p57 = por %p55, %p56
      %p59 = scmp.ne.s32.totalorder %s42, %s58
      %p60 = scmp.eq.s32.totalorder %s20, 0
      %p61 = por %p59, %p60
      %s63 = sadd.s32 %s62, 1
      %p66 = scmp.eq.s32.totalorder %s14, 1
      %p67 = scmp.ne.s32.totalorder %s62, %s64
      %p68 = scmp.eq.s32.totalorder %s14, 0
      %p69 = por %p67, %p68
      %p70 = scmp.ne.s32.totalorder %s62, %s64
      %p71 = scmp.eq.s32.totalorder %s19, 1
      %p72 = por %p70, %p71
      %p73 = scmp.ne.s32.totalorder %s64, %s65
      %p74 = scmp.eq.s32.totalorder %s19, 0
      %p75 = por %p73, %p74
      %p76 = scmp.ne.s32.totalorder %s64, %s65
      %p77 = scmp.eq.s32.totalorder %s20, 1
      %p78 = por %p76, %p77
      %p80 = scmp.ne.s32.totalorder %s65, %s79
      %p81 = scmp.eq.s32.totalorder %s20, 0
      %p82 = por %p80, %p81
      %s83 = ssub.s32 %s22, %s29
      %p84 = scmp.eq.s32.totalorder %s83, 0
      %s86 = sadd.s32 %s85, 1
      %s87 = scalar_select %p84, %s85, %s86
      %p90 = pneg %p84
      %p91 = scmp.eq.s32.totalorder %s14, 1
      %p92 = por %p90, %p91
      %p93 = scmp.ne.s32.totalorder %s85, %s88
      %p94 = scmp.eq.s32.totalorder %s14, 0
      %p95 = por %p93, %p94
      %p96 = scmp.ne.s32.totalorder %s85, %s88
      %p97 = scmp.eq.s32.totalorder %s19, 1
      %p98 = por %p96, %p97
      %p99 = scmp.ne.s32.totalorder %s88, %s89
      %p100 = scmp.eq.s32.totalorder %s19, 0
      %p101 = por %p99, %p100
      %p102 = scmp.ne.s32.totalorder %s88, %s89
      %p103 = scmp.eq.s32.totalorder %s20, 1
      %p104 = por %p102, %p103
      %p106 = scmp.ne.s32.totalorder %s89, %s105
      %p107 = scmp.eq.s32.totalorder %s20, 0
      %p108 = por %p106, %p107
      %s110 = sadd.s32 %s109, 1
      %p113 = scmp.eq.s32.totalorder %s14, 1
      %p114 = scmp.ne.s32.totalorder %s109, %s111
      %p115 = scmp.eq.s32.totalorder %s14, 0
      %p116 = por %p114, %p115
      %p117 = scmp.ne.s32.totalorder %s109, %s111
      %p118 = scmp.eq.s32.totalorder %s19, 1
      %p119 = por %p117, %p118
      %p120 = scmp.ne.s32.totalorder %s111, %s112
      %p121 = scmp.eq.s32.totalorder %s19, 0
      %p122 = por %p120, %p121
      %p123 = scmp.ne.s32.totalorder %s111, %s112
      %p124 = scmp.eq.s32.totalorder %s20, 1
      %p125 = por %p123, %p124
      %p127 = scmp.ne.s32.totalorder %s112, %s126
      %p128 = scmp.eq.s32.totalorder %s20, 0
      %p129 = por %p127, %p128
      %s131 = sadd.s32 %s130, 1
      %p134 = scmp.eq.s32.totalorder %s14, 1
      %p135 = scmp.ne.s32.totalorder %s130, %s132
      %p136 = scmp.eq.s32.totalorder %s14, 0
      %p137 = por %p135, %p136
      %p138 = scmp.ne.s32.totalorder %s130, %s132
      %p139 = scmp.eq.s32.totalorder %s19, 1
      %p140 = por %p138, %p139
      %p141 = scmp.ne.s32.totalorder %s132, %s133
      %p142 = scmp.eq.s32.totalorder %s19, 0
      %p143 = por %p141, %p142
      %p144 = scmp.ne.s32.totalorder %s132, %s133
      %p145 = scmp.eq.s32.totalorder %s20, 1
      %p146 = por %p144, %p145
      %p148 = scmp.ne.s32.totalorder %s133, %s147
      %p149 = scmp.eq.s32.totalorder %s20, 0
      %p150 = por %p148, %p149
      %s151 = ssub.s32 %s21, %s33
      %p152 = scmp.eq.s32.totalorder %s151, 0
      %s154 = sadd.s32 %s153, 1
      %s155 = scalar_select %p152, %s153, %s154
      %p158 = pneg %p152
      %p159 = scmp.eq.s32.totalorder %s14, 1
      %p160 = por %p158, %p159
      %p161 = scmp.ne.s32.totalorder %s153, %s156
      %p162 = scmp.eq.s32.totalorder %s14, 0
      %p163 = por %p161, %p162
      %p164 = scmp.ne.s32.totalorder %s153, %s156
      %p165 = scmp.eq.s32.totalorder %s19, 1
      %p166 = por %p164, %p165
      %p167 = scmp.ne.s32.totalorder %s156, %s157
      %p168 = scmp.eq.s32.totalorder %s19, 0
      %p169 = por %p167, %p168
      %p170 = scmp.ne.s32.totalorder %s156, %s157
      %p171 = scmp.eq.s32.totalorder %s20, 1
      %p172 = por %p170, %p171
      %p174 = scmp.ne.s32.totalorder %s157, %s173
      %p175 = scmp.eq.s32.totalorder %s20, 0
      %p176 = por %p174, %p175
      %p177 = scmp.le.s32.totalorder 1, %s14
      %p178 = scmp.lt.s32.totalorder %s14, 3
      %p179 = pnand %p177, %p178
      %p180 = pneg %p179
      // Predicated region
      $region9: #{tpu_custom_call.1} parent=5 // pred_check
        _
      $region10: #{tpu_custom_call.1} parent=5 // pred_check_branch
        %182 = sbr.rel (%p179) target = $region12
      $region11: #{tpu_custom_call.1} parent=5 // pred_region
        %s183 = ssub.s32 %s14, 1
        // Predicated region
        $region13: #{tpu_custom_call.1} parent=11 // pred_check
          %p184 = pneg %p75
        $region14: #{tpu_custom_call.1} parent=11 // pred_check_branch
          %186 = sbr.rel (%p184) target = $region16
        $region15: #{tpu_custom_call.1} parent=11 // pred_region
          _
        $region16: #{tpu_custom_call.1} parent=11 // pred_fallthru
          _
        // Predicated region
        $region17: #{tpu_custom_call.1} parent=11 // pred_check
          %p187 = pneg %p101
        $region18: #{tpu_custom_call.1} parent=11 // pred_check_branch
          %189 = sbr.rel (%p187) target = $region20
        $region19: #{tpu_custom_call.1} parent=11 // pred_region
          %p190 = scmp.lt.s32.totalorder %s24, 0
          %s191 = scalar_select %p190, %s24, 0
          %s192 = smul.addr %s191, 4
          %s193 = scalar_lea.vmem %s2, %s192
        $region20: #{tpu_custom_call.1} parent=11 // pred_fallthru
          _
        // Predicated region
        $region21: #{tpu_custom_call.1} parent=11 // pred_check
          %p194 = pneg %p122
        $region22: #{tpu_custom_call.1} parent=11 // pred_check_branch
          %196 = sbr.rel (%p194) target = $region24
        $region23: #{tpu_custom_call.1} parent=11 // pred_region
          _
        $region24: #{tpu_custom_call.1} parent=11 // pred_fallthru
          _
        // Predicated region
        $region25: #{tpu_custom_call.1} parent=11 // pred_check
          %p197 = pneg %p143
        $region26: #{tpu_custom_call.1} parent=11 // pred_check_branch
          %199 = sbr.rel (%p197) target = $region28
        $region27: #{tpu_custom_call.1} parent=11 // pred_region
          _
        $region28: #{tpu_custom_call.1} parent=11 // pred_fallthru
          _
      $region12: #{tpu_custom_call.1} parent=5 // pred_fallthru
        _
      %p200 = scmp.lt.s32.totalorder %s14, 2
      // Predicated region
      $region29: #{tpu_custom_call.1} parent=5 // pred_check
        %p201 = pneg %p200
      $region30: #{tpu_custom_call.1} parent=5 // pred_check_branch
        %203 = sbr.rel (%p201) target = $region32
      $region31: #{tpu_custom_call.1} parent=5 // pred_region
        // Predicated region
        $region33: #{tpu_custom_call.1} parent=31 // pred_check
          %p204 = pneg %p48
        $region34: #{tpu_custom_call.1} parent=31 // pred_check_branch
          %206 = sbr.rel (%p204) target = $region36
        $region35: #{tpu_custom_call.1} parent=31 // pred_region
          %s207 = smul.u32 4, %s22
          %p208 = scmp.lt.s32.totalorder %s21, 1
          %s209 = scalar_select %p208, %s21, 1
          %p210 = scmp.lt.s32.totalorder %s207, 3
          %s211 = scalar_select %p210, %s207, 3
          %s212 = smul.addr %s211, 2
          %s213 = smul.addr %s209, 8
          %s214 = sadd.s32 %s212, %s213
          %s215 = smul.addr %s214, 4
          %s216 = scalar_lea.vmem %s0, %s215
          %s217 = smul.u32 4, %s22
        $region36: #{tpu_custom_call.1} parent=31 // pred_fallthru
          _
      $region32: #{tpu_custom_call.1} parent=5 // pred_fallthru
        _
      %p218 = scmp.le.s32.totalorder 1, %s14
      %p219 = scmp.lt.s32.totalorder %s14, 3
      %p220 = pnand %p218, %p219
      %p221 = pneg %p220
      // Predicated region
      $region37: #{tpu_custom_call.1} parent=5 // pred_check
        _
      $region38: #{tpu_custom_call.1} parent=5 // pred_check_branch
        %223 = sbr.rel (%p220) target = $region40
      $region39: #{tpu_custom_call.1} parent=5 // pred_region
        %s224 = ssub.s32 %s14, 1
        %s225 = smul.u32 4, %s24
        %p226 = scmp.lt.s32.totalorder %s23, 1
        %s227 = scalar_select %p226, %s23, 1
        %p228 = scmp.lt.s32.totalorder %s225, 3
        %s229 = scalar_select %p228, %s225, 3
        %s230 = smul.addr %s229, 2
        %s231 = smul.addr %s227, 8
        %s232 = sadd.s32 %s230, %s231
        %s233 = smul.addr %s232, 4
        %s234 = scalar_lea.vmem %s0, %s233
        %p235 = pneg %p54
        %p236 = pneg %p51
        %p237 = pneg %p75
        %p238 = pneg %p72
        %p239 = scmp.lt.s32.totalorder %s24, 0
        %s240 = scalar_select %p239, %s24, 0
        %s241 = smul.addr %s240, 4
        %s242 = scalar_lea.vmem %s2, %s241
        %p243 = pneg %p101
        %p244 = pneg %p98
        %p245 = pneg %p122
        %p246 = pneg %p119
        %p247 = pneg %p143
        %p248 = pneg %p140
        %p249 = pneg %p169
        %p250 = pneg %p166
        %s251 = sand.u32 %s156, 1
        %s252 = scalar_lea.sflag [#allocation4], %s251
        %s253 = sand.u32 %s156, 1
        %s254 = smul.addr %s253, 128
        %s255 = scalar_lea.vmem [#allocation3], %s254
        %s256 = smul.u32 4, %s24
        %p257 = scmp.lt.s32.totalorder %s23, 1
        %s258 = scalar_select %p257, %s23, 1
        %p259 = scmp.lt.s32.totalorder %s256, 3
        %s260 = scalar_select %p259, %s256, 3
        %s261 = smul.addr %s260, 2
        %s262 = smul.addr %s258, 8
        %s263 = sadd.s32 %s261, %s262
        %s264 = smul.addr %s263, 4
        %s265 = scalar_lea.vmem %s0, %s264
        %s266 = smul.u32 4, %s24
        %p267 = scmp.lt.s32.totalorder %s24, 0
        %s268 = scalar_select %p267, %s24, 0
        %s269 = smul.addr %s268, 4
        %s270 = scalar_lea.vmem %s2, %s269
        %p272 = scmp.eq.s32.totalorder %s24, 0
        // Predicated region
        $region41: #{tpu_custom_call.1} parent=39 // pred_check
          %p273 = pneg %p272
        $region42: #{tpu_custom_call.1} parent=39 // pred_check_branch
          %275 = sbr.rel (%p273) target = $region44
        $region43: #{tpu_custom_call.1} parent=39 // pred_region
          %vm276 = vcmask 293888
          %277 = vst.msk [vmem:[#allocation2] sm:$0xff] %vm276, 0.0
          %278 = vst.msk [vmem:[#allocation2 + $0x8] sm:$0xff] %vm276, 0.0
          %279 = vst.msk [vmem:[#allocation2 + $0x10] sm:$0xff] %vm276, 0.0
          %280 = vst.msk [vmem:[#allocation2 + $0x18] sm:$0xff] %vm276, 0.0
          %281 = vst.msk [vmem:[#allocation2 + $0x20] sm:$0xff] %vm276, 0.0
          %282 = vst.msk [vmem:[#allocation2 + $0x28] sm:$0xff] %vm276, 0.0
          %283 = vst.msk [vmem:[#allocation2 + $0x30] sm:$0xff] %vm276, 0.0
          %284 = vst.msk [vmem:[#allocation2 + $0x38] sm:$0xff] %vm276, 0.0
        $region44: #{tpu_custom_call.1} parent=39 // pred_fallthru
          _
        %v285 = vld [vmem:[%s265] sm:$0xff]
        %v286 = vld [vmem:[%s265 + $0x8] sm:$0xff]
        %v287 = vld [vmem:[%s265 + $0x10] sm:$0xff]
        %v288 = vld [vmem:[%s265 + $0x18] sm:$0xff]
        %v289 = vld [vmem:[%s1] sm:$0xff]
        %v290 = vld [vmem:[%s1 + $0x8] sm:$0xff]
        %v291 = vld [vmem:[%s1 + $0x10] sm:$0xff]
        %v292 = vld [vmem:[%s1 + $0x18] sm:$0xff]
        %v293 = vld [vmem:[%s1 + $0x20] sm:$0xff]
        %v294 = vld [vmem:[%s1 + $0x28] sm:$0xff]
        %v295 = vld [vmem:[%s1 + $0x30] sm:$0xff]
        %v296 = vld [vmem:[%s1 + $0x38] sm:$0xff]
        %v297 = vld [vmem:[%s1 + $0x40] sm:$0xff]
        %v298 = vld [vmem:[%s1 + $0x48] sm:$0xff]
        %v299 = vld [vmem:[%s1 + $0x50] sm:$0xff]
        %v300 = vld [vmem:[%s1 + $0x58] sm:$0xff]
        %v301 = vld [vmem:[%s1 + $0x60] sm:$0xff]
        %v302 = vld [vmem:[%s1 + $0x68] sm:$0xff]
        %v303 = vld [vmem:[%s1 + $0x70] sm:$0xff]
        %v304 = vld [vmem:[%s1 + $0x78] sm:$0xff]
        %v305 = vld [vmem:[%s1 + $0x80] sm:$0xff]
        %v306 = vld [vmem:[%s1 + $0x88] sm:$0xff]
        %v307 = vld [vmem:[%s1 + $0x90] sm:$0xff]
        %v308 = vld [vmem:[%s1 + $0x98] sm:$0xff]
        %v309 = vld [vmem:[%s1 + $0xa0] sm:$0xff]
        %v310 = vld [vmem:[%s1 + $0xa8] sm:$0xff]
        %v311 = vld [vmem:[%s1 + $0xb0] sm:$0xff]
        %v312 = vld [vmem:[%s1 + $0xb8] sm:$0xff]
        %v313 = vld [vmem:[%s1 + $0xc0] sm:$0xff]
        %v314 = vld [vmem:[%s1 + $0xc8] sm:$0xff]
        %v315 = vld [vmem:[%s1 + $0xd0] sm:$0xff]
        %v316 = vld [vmem:[%s1 + $0xd8] sm:$0xff]
        %v317 = vld [vmem:[%s1 + $0xe0] sm:$0xff]
        %v318 = vld [vmem:[%s1 + $0xe8] sm:$0xff]
        %v319 = vld [vmem:[%s1 + $0xf0] sm:$0xff]
        %v320 = vld [vmem:[%s1 + $0xf8] sm:$0xff]
        %v325 = vunpack.c.l.b16 %v285
        %v326 = vunpack.c.h.b16 %v285
        %v327 = vunpack.c.l.b16 %v286
        %v328 = vunpack.c.h.b16 %v286
        %v329 = vunpack.c.l.b16 %v287
        %v330 = vunpack.c.h.b16 %v287
        %v331 = vunpack.c.l.b16 %v288
        %v332 = vunpack.c.h.b16 %v288
        %v333 = vpack.c.b16 %v327, %v325
        %v334 = vpack.c.b16 %v328, %v326
        %v335 = vpack.c.b16 %v331, %v329
        %v336 = vpack.c.b16 %v332, %v330
        %v373 = vunpack.c.l.b16 %v289
        %v374 = vunpack.c.h.b16 %v289
        %v375 = vunpack.c.l.b16 %v290
        %v376 = vunpack.c.h.b16 %v290
        %v377 = vunpack.c.l.b16 %v291
        %v378 = vunpack.c.h.b16 %v291
        %v379 = vunpack.c.l.b16 %v292
        %v380 = vunpack.c.h.b16 %v292
        %v381 = vunpack.c.l.b16 %v293
        %v382 = vunpack.c.h.b16 %v293
        %v383 = vunpack.c.l.b16 %v294
        %v384 = vunpack.c.h.b16 %v294
        %v385 = vunpack.c.l.b16 %v295
        %v386 = vunpack.c.h.b16 %v295
        %v387 = vunpack.c.l.b16 %v296
        %v388 = vunpack.c.h.b16 %v296
        %v389 = vunpack.c.l.b16 %v297
        %v390 = vunpack.c.h.b16 %v297
        %v391 = vunpack.c.l.b16 %v298
        %v392 = vunpack.c.h.b16 %v298
        %v393 = vunpack.c.l.b16 %v299
        %v394 = vunpack.c.h.b16 %v299
        %v395 = vunpack.c.l.b16 %v300
        %v396 = vunpack.c.h.b16 %v300
        %v397 = vunpack.c.l.b16 %v301
        %v398 = vunpack.c.h.b16 %v301
        %v399 = vunpack.c.l.b16 %v302
        %v400 = vunpack.c.h.b16 %v302
        %v401 = vunpack.c.l.b16 %v303
        %v402 = vunpack.c.h.b16 %v303
        %v403 = vunpack.c.l.b16 %v304
        %v404 = vunpack.c.h.b16 %v304
        %v405 = vunpack.c.l.b16 %v305
        %v406 = vunpack.c.h.b16 %v305
        %v407 = vunpack.c.l.b16 %v306
        %v408 = vunpack.c.h.b16 %v306
        %v409 = vunpack.c.l.b16 %v307
        %v410 = vunpack.c.h.b16 %v307
        %v411 = vunpack.c.l.b16 %v308
        %v412 = vunpack.c.h.b16 %v308
        %v413 = vunpack.c.l.b16 %v309
        %v414 = vunpack.c.h.b16 %v309
        %v415 = vunpack.c.l.b16 %v310
        %v416 = vunpack.c.h.b16 %v310
        %v417 = vunpack.c.l.b16 %v311
        %v418 = vunpack.c.h.b16 %v311
        %v419 = vunpack.c.l.b16 %v312
        %v420 = vunpack.c.h.b16 %v312
        %v421 = vunpack.c.l.b16 %v313
        %v422 = vunpack.c.h.b16 %v313
        %v423 = vunpack.c.l.b16 %v314
        %v424 = vunpack.c.h.b16 %v314
        %v425 = vunpack.c.l.b16 %v315
        %v426 = vunpack.c.h.b16 %v315
        %v427 = vunpack.c.l.b16 %v316
        %v428 = vunpack.c.h.b16 %v316
        %v429 = vunpack.c.l.b16 %v317
        %v430 = vunpack.c.h.b16 %v317
        %v431 = vunpack.c.l.b16 %v318
        %v432 = vunpack.c.h.b16 %v318
        %v433 = vunpack.c.l.b16 %v319
        %v434 = vunpack.c.h.b16 %v319
        %v435 = vunpack.c.l.b16 %v320
        %v436 = vunpack.c.h.b16 %v320
        %v437 = vpack.c.b16 %v375, %v373
        %v438 = vpack.c.b16 %v376, %v374
        %v439 = vpack.c.b16 %v379, %v377
        %v440 = vpack.c.b16 %v380, %v378
        %v441 = vpack.c.b16 %v383, %v381
        %v442 = vpack.c.b16 %v384, %v382
        %v443 = vpack.c.b16 %v387, %v385
        %v444 = vpack.c.b16 %v388, %v386
        %v445 = vpack.c.b16 %v391, %v389
        %v446 = vpack.c.b16 %v392, %v390
        %v447 = vpack.c.b16 %v395, %v393
        %v448 = vpack.c.b16 %v396, %v394
        %v449 = vpack.c.b16 %v399, %v397
        %v450 = vpack.c.b16 %v400, %v398
        %v451 = vpack.c.b16 %v403, %v401
        %v452 = vpack.c.b16 %v404, %v402
        %v453 = vpack.c.b16 %v407, %v405
        %v454 = vpack.c.b16 %v408, %v406
        %v455 = vpack.c.b16 %v411, %v409
        %v456 = vpack.c.b16 %v412, %v410
        %v457 = vpack.c.b16 %v415, %v413
        %v458 = vpack.c.b16 %v416, %v414
        %v459 = vpack.c.b16 %v419, %v417
        %v460 = vpack.c.b16 %v420, %v418
        %v461 = vpack.c.b16 %v423, %v421
        %v462 = vpack.c.b16 %v424, %v422
        %v463 = vpack.c.b16 %v427, %v425
        %v464 = vpack.c.b16 %v428, %v426
        %v465 = vpack.c.b16 %v431, %v429
        %v466 = vpack.c.b16 %v432, %v430
        %v467 = vpack.c.b16 %v435, %v433
        %v468 = vpack.c.b16 %v436, %v434
        %501 = vmatprep.subr.bf16.mxu0 %v438
        %502 = vmatpush1.bf16.msra.mxu0 %v437
        %503 = vmatprep.subr.bf16.mxu0 %v440
        %504 = vmatpush1.bf16.msra.mxu0 %v439
        %505 = vmatprep.subr.bf16.mxu0 %v442
        %506 = vmatpush1.bf16.msra.mxu0 %v441
        %507 = vmatprep.subr.bf16.mxu0 %v444
        %508 = vmatpush1.bf16.msra.mxu0 %v443
        %509 = vmatprep.subr.bf16.mxu0 %v446
        %510 = vmatpush1.bf16.msra.mxu0 %v445
        %511 = vmatprep.subr.bf16.mxu0 %v448
        %512 = vmatpush1.bf16.msra.mxu0 %v447
        %513 = vmatprep.subr.bf16.mxu0 %v450
        %514 = vmatpush1.bf16.msra.mxu0 %v449
        %515 = vmatprep.subr.bf16.mxu0 %v452
        %516 = vmatpush1.bf16.msra.mxu0 %v451
        %517 = vmatprep.subr.bf16.mxu0 %v454
        %518 = vmatpush1.bf16.msra.mxu0 %v453
        %519 = vmatprep.subr.bf16.mxu0 %v456
        %520 = vmatpush1.bf16.msra.mxu0 %v455
        %521 = vmatprep.subr.bf16.mxu0 %v458
        %522 = vmatpush1.bf16.msra.mxu0 %v457
        %523 = vmatprep.subr.bf16.mxu0 %v460
        %524 = vmatpush1.bf16.msra.mxu0 %v459
        %525 = vmatprep.subr.bf16.mxu0 %v462
        %526 = vmatpush1.bf16.msra.mxu0 %v461
        %527 = vmatprep.subr.bf16.mxu0 %v464
        %528 = vmatpush1.bf16.msra.mxu0 %v463
        %529 = vmatprep.subr.bf16.mxu0 %v466
        %530 = vmatpush1.bf16.msra.mxu0 %v465
        %531 = vmatprep.subr.bf16.mxu0 %v468
        %532 = vmatpush1.bf16.msra.mxu0 %v467
        %533 = vmatprep.mubr.bf16.mxu0 %v334
        %534 = vmatmul.mubr.bf16.gmra.mrb[0].mxu0 %v333
        %v535 = vpop.f32.mrb[0].mxu0
        %v536 = vadd.f32 0.0, %v535
        %v537 = vpop.f32.mrb[0].mxu0
        %v538 = vadd.f32 0.0, %v537
        %v539 = vpop.f32.mrb[0].mxu0
        %v540 = vadd.f32 0.0, %v539
        %v541 = vpop.f32.mrb[0].mxu0
        %v542 = vadd.f32 0.0, %v541
        %543 = vmatprep.mubr.bf16.mxu0 %v336
        %544 = vmatmul.mubr.bf16.gmra.mrb[0].mxu0 %v335
        %v545 = vpop.f32.mrb[0].mxu0
        %v546 = vadd.f32 0.0, %v545
        %v547 = vpop.f32.mrb[0].mxu0
        %v548 = vadd.f32 0.0, %v547
        %v549 = vpop.f32.mrb[0].mxu0
        %v550 = vadd.f32 0.0, %v549
        %v551 = vpop.f32.mrb[0].mxu0
        %v552 = vadd.f32 0.0, %v551
        %553 = vdwg.mxu0
        %v554 = vpack.c.bf16 %v540, %v536
        %v555 = vpack.c.bf16 %v542, %v538
        %v556 = vpack.c.bf16 %v550, %v546
        %v557 = vpack.c.bf16 %v552, %v548
        %v558 = vld [vmem:[#allocation2] sm:$0xff]
        %v559 = vld [vmem:[#allocation2 + $0x8] sm:$0xff]
        %v560 = vld [vmem:[%s270] sm:$0xf]
        %v561 = vld [vmem:[%s270 + $0x4] sm:$0xf]
        %v564 = vunpack.c.l.b16 %v560
        %v565 = vunpack.c.l.b16 %v561
        %v566 = vpack.c.b16 %v565, %v564
        %vm567 = vcmask 261120
        %v569 = vsel %vm567, %v566, 0
        %571 = vmatprep.subr.bf16.mxu0 0
        %572 = vmatpush1.bf16.msra.mxu0 %v554
        %573 = vmatprep.subr.bf16.mxu0 0
        %574 = vmatpush1.bf16.msra.mxu0 %v556
        %575 = vmatprep.subr.bf16.mxu0 0
        %576 = vmatpush1.bf16.msra.mxu0 0
        %577 = vmatprep.subr.bf16.mxu0 0
        %578 = vmatpush1.bf16.msra.mxu0 0
        %579 = vmatprep.subr.bf16.mxu0 0
        %580 = vmatpush1.bf16.msra.mxu0 0
        %581 = vmatprep.subr.bf16.mxu0 0
        %582 = vmatpush1.bf16.msra.mxu0 0
        %583 = vmatprep.subr.bf16.mxu0 0
        %584 = vmatpush1.bf16.msra.mxu0 0
        %585 = vmatprep.subr.bf16.mxu0 0
        %586 = vmatpush1.bf16.msra.mxu0 0
        %587 = vmatprep.subr.bf16.mxu0 0
        %588 = vmatpush1.bf16.msra.mxu0 0
        %589 = vmatprep.subr.bf16.mxu0 0
        %590 = vmatpush1.bf16.msra.mxu0 0
        %591 = vmatprep.subr.bf16.mxu0 0
        %592 = vmatpush1.bf16.msra.mxu0 0
        %593 = vmatprep.subr.bf16.mxu0 0
        %594 = vmatpush1.bf16.msra.mxu0 0
        %595 = vmatprep.subr.bf16.mxu0 0
        %596 = vmatpush1.bf16.msra.mxu0 0
        %597 = vmatprep.subr.bf16.mxu0 0
        %598 = vmatpush1.bf16.msra.mxu0 0
        %599 = vmatprep.subr.bf16.mxu0 0
        %600 = vmatpush1.bf16.msra.mxu0 0
        %601 = vmatprep.subr.bf16.mxu0 0
        %602 = vmatpush1.bf16.msra.mxu0 0
        %603 = vmatprep.mubr.bf16.mxu0 0
        %604 = vmatmul.mubr.bf16.gmra.mrb[0].mxu0 %v569
        %v605 = vpop.f32.mrb[0].mxu0
        %v606 = vadd.f32 0.0, %v605
        %v607 = vpop.f32.mrb[0].mxu0
        %v608 = vpop.f32.mrb[0].mxu0
        %v609 = vadd.f32 0.0, %v608
        %v610 = vpop.f32.mrb[0].mxu0
        %611 = vdwg.mxu0
        %v612 = vadd.f32 %v558, %v606
        %v613 = vadd.f32 %v559, %v609
        %vm614 = vcmask 293888
        %615 = vst.msk [vmem:[#allocation2] sm:$0xff] %vm614, %v612
        %616 = vst.msk [vmem:[#allocation2 + $0x8] sm:$0xff] %vm614, %v613
        %s617 = scalar_lea.vmem [#allocation2], 16
        %v618 = vld [vmem:[%s617] sm:$0xff]
        %v619 = vld [vmem:[%s617 + $0x8] sm:$0xff]
        %s620 = scalar_lea.vmem %s270, 8
        %v621 = vld [vmem:[%s620] sm:$0xf]
        %v622 = vld [vmem:[%s620 + $0x4] sm:$0xf]
        %v625 = vunpack.c.l.b16 %v621
        %v626 = vunpack.c.l.b16 %v622
        %v627 = vpack.c.b16 %v626, %v625
        %630 = vrot.lane.b32.xlu0 %v554, 92
        %v631 = vpop.permute.xlu0 %630
        %632 = vrot.lane.b32.xlu0 %v556, 92
        %v633 = vpop.permute.xlu0 %632
        %v637 = vsel %vm567, %v627, 0
        %639 = vmatprep.subr.bf16.mxu0 0
        %640 = vmatpush1.bf16.msra.mxu0 %v631
        %641 = vmatprep.subr.bf16.mxu0 0
        %642 = vmatpush1.bf16.msra.mxu0 %v633
        %643 = vmatprep.subr.bf16.mxu0 0
        %644 = vmatpush1.bf16.msra.mxu0 0
        %645 = vmatprep.subr.bf16.mxu0 0
        %646 = vmatpush1.bf16.msra.mxu0 0
        %647 = vmatprep.subr.bf16.mxu0 0
        %648 = vmatpush1.bf16.msra.mxu0 0
        %649 = vmatprep.subr.bf16.mxu0 0
        %650 = vmatpush1.bf16.msra.mxu0 0
        %651 = vmatprep.subr.bf16.mxu0 0
        %652 = vmatpush1.bf16.msra.mxu0 0
        %653 = vmatprep.subr.bf16.mxu0 0
        %654 = vmatpush1.bf16.msra.mxu0 0
        %655 = vmatprep.subr.bf16.mxu0 0
        %656 = vmatpush1.bf16.msra.mxu0 0
        %657 = vmatprep.subr.bf16.mxu0 0
        %658 = vmatpush1.bf16.msra.mxu0 0
        %659 = vmatprep.subr.bf16.mxu0 0
        %660 = vmatpush1.bf16.msra.mxu0 0
        %661 = vmatprep.subr.bf16.mxu0 0
        %662 = vmatpush1.bf16.msra.mxu0 0
        %663 = vmatprep.subr.bf16.mxu0 0
        %664 = vmatpush1.bf16.msra.mxu0 0
        %665 = vmatprep.subr.bf16.mxu0 0
        %666 = vmatpush1.bf16.msra.mxu0 0
        %667 = vmatprep.subr.bf16.mxu0 0
        %668 = vmatpush1.bf16.msra.mxu0 0
        %669 = vmatprep.subr.bf16.mxu0 0
        %670 = vmatpush1.bf16.msra.mxu0 0
        %671 = vmatprep.mubr.bf16.mxu0 0
        %672 = vmatmul.mubr.bf16.gmra.mrb[0].mxu0 %v637
        %v673 = vpop.f32.mrb[0].mxu0
        %v674 = vadd.f32 0.0, %v673
        %v675 = vpop.f32.mrb[0].mxu0
        %v676 = vpop.f32.mrb[0].mxu0
        %v677 = vadd.f32 0.0, %v676
        %v678 = vpop.f32.mrb[0].mxu0
        %679 = vdwg.mxu0
        %v680 = vadd.f32 %v618, %v674
        %v681 = vadd.f32 %v619, %v677
        %682 = vst.msk [vmem:[%s617] sm:$0xff] %vm614, %v680
        %683 = vst.msk [vmem:[%s617 + $0x8] sm:$0xff] %vm614, %v681
        %s684 = scalar_lea.vmem [#allocation2], 32
        %v685 = vld [vmem:[%s684] sm:$0xff]
        %v686 = vld [vmem:[%s684 + $0x8] sm:$0xff]
        %s687 = scalar_lea.vmem %s270, 16
        %v688 = vld [vmem:[%s687] sm:$0xf]
        %v689 = vld [vmem:[%s687 + $0x4] sm:$0xf]
        %v692 = vunpack.c.l.b16 %v688
        %v693 = vunpack.c.l.b16 %v689
        %v694 = vpack.c.b16 %v693, %v692
        %695 = vrot.lane.b32.xlu0 %v554, 56
        %v696 = vpop.permute.xlu0 %695
        %697 = vrot.lane.b32.xlu0 %v556, 56
        %v698 = vpop.permute.xlu0 %697
        %v702 = vsel %vm567, %v694, 0
        %704 = vmatprep.subr.bf16.mxu0 0
        %705 = vmatpush1.bf16.msra.mxu0 %v696
        %706 = vmatprep.subr.bf16.mxu0 0
        %707 = vmatpush1.bf16.msra.mxu0 %v698
        %708 = vmatprep.subr.bf16.mxu0 0
        %709 = vmatpush1.bf16.msra.mxu0 0
        %710 = vmatprep.subr.bf16.mxu0 0
        %711 = vmatpush1.bf16.msra.mxu0 0
        %712 = vmatprep.subr.bf16.mxu0 0
        %713 = vmatpush1.bf16.msra.mxu0 0
        %714 = vmatprep.subr.bf16.mxu0 0
        %715 = vmatpush1.bf16.msra.mxu0 0
        %716 = vmatprep.subr.bf16.mxu0 0
        %717 = vmatpush1.bf16.msra.mxu0 0
        %718 = vmatprep.subr.bf16.mxu0 0
        %719 = vmatpush1.bf16.msra.mxu0 0
        %720 = vmatprep.subr.bf16.mxu0 0
        %721 = vmatpush1.bf16.msra.mxu0 0
        %722 = vmatprep.subr.bf16.mxu0 0
        %723 = vmatpush1.bf16.msra.mxu0 0
        %724 = vmatprep.subr.bf16.mxu0 0
        %725 = vmatpush1.bf16.msra.mxu0 0
        %726 = vmatprep.subr.bf16.mxu0 0
        %727 = vmatpush1.bf16.msra.mxu0 0
        %728 = vmatprep.subr.bf16.mxu0 0
        %729 = vmatpush1.bf16.msra.mxu0 0
        %730 = vmatprep.subr.bf16.mxu0 0
        %731 = vmatpush1.bf16.msra.mxu0 0
        %732 = vmatprep.subr.bf16.mxu0 0
        %733 = vmatpush1.bf16.msra.mxu0 0
        %734 = vmatprep.subr.bf16.mxu0 0
        %735 = vmatpush1.bf16.msra.mxu0 0
        %736 = vmatprep.mubr.bf16.mxu0 0
        %737 = vmatmul.mubr.bf16.gmra.mrb[0].mxu0 %v702
        %v738 = vpop.f32.mrb[0].mxu0
        %v739 = vadd.f32 0.0, %v738
        %v740 = vpop.f32.mrb[0].mxu0
        %v741 = vpop.f32.mrb[0].mxu0
        %v742 = vadd.f32 0.0, %v741
        %v743 = vpop.f32.mrb[0].mxu0
        %744 = vdwg.mxu0
        %v745 = vadd.f32 %v685, %v739
        %v746 = vadd.f32 %v686, %v742
        %747 = vst.msk [vmem:[%s684] sm:$0xff] %vm614, %v745
        %748 = vst.msk [vmem:[%s684 + $0x8] sm:$0xff] %vm614, %v746
        %s749 = scalar_lea.vmem [#allocation2], 48
        %v750 = vld [vmem:[%s749] sm:$0xff]
        %v751 = vld [vmem:[%s749 + $0x8] sm:$0xff]
        %s752 = scalar_lea.vmem %s270, 24
        %v753 = vld [vmem:[%s752] sm:$0xf]
        %v754 = vld [vmem:[%s752 + $0x4] sm:$0xf]
        %v757 = vunpack.c.l.b16 %v753
        %v758 = vunpack.c.l.b16 %v754
        %v759 = vpack.c.b16 %v758, %v757
        %762 = vrot.lane.b32.xlu0 %v554, 20
        %v763 = vpop.permute.xlu0 %762
        %764 = vrot.lane.b32.xlu0 %v555, 20
        %v765 = vpop.permute.xlu0 %764
        %766 = vrot.lane.b32.xlu0 %v556, 20
        %v767 = vpop.permute.xlu0 %766
        %768 = vrot.lane.b32.xlu0 %v557, 20
        %v769 = vpop.permute.xlu0 %768
        %vm770 = vcmask 162816
        %v771 = vsel %vm770, %v763, %v765
        %v772 = vsel %vm770, %v767, %v769
        %v776 = vsel %vm567, %v759, 0
        %778 = vmatprep.subr.bf16.mxu0 0
        %779 = vmatpush1.bf16.msra.mxu0 %v771
        %780 = vmatprep.subr.bf16.mxu0 0
        %781 = vmatpush1.bf16.msra.mxu0 %v772
        %782 = vmatprep.subr.bf16.mxu0 0
        %783 = vmatpush1.bf16.msra.mxu0 0
        %784 = vmatprep.subr.bf16.mxu0 0
        %785 = vmatpush1.bf16.msra.mxu0 0
        %786 = vmatprep.subr.bf16.mxu0 0
        %787 = vmatpush1.bf16.msra.mxu0 0
        %788 = vmatprep.subr.bf16.mxu0 0
        %789 = vmatpush1.bf16.msra.mxu0 0
        %790 = vmatprep.subr.bf16.mxu0 0
        %791 = vmatpush1.bf16.msra.mxu0 0
        %792 = vmatprep.subr.bf16.mxu0 0
        %793 = vmatpush1.bf16.msra.mxu0 0
        %794 = vmatprep.subr.bf16.mxu0 0
        %795 = vmatpush1.bf16.msra.mxu0 0
        %796 = vmatprep.subr.bf16.mxu0 0
        %797 = vmatpush1.bf16.msra.mxu0 0
        %798 = vmatprep.subr.bf16.mxu0 0
        %799 = vmatpush1.bf16.msra.mxu0 0
        %800 = vmatprep.subr.bf16.mxu0 0
        %801 = vmatpush1.bf16.msra.mxu0 0
        %802 = vmatprep.subr.bf16.mxu0 0
        %803 = vmatpush1.bf16.msra.mxu0 0
        %804 = vmatprep.subr.bf16.mxu0 0
        %805 = vmatpush1.bf16.msra.mxu0 0
        %806 = vmatprep.subr.bf16.mxu0 0
        %807 = vmatpush1.bf16.msra.mxu0 0
        %808 = vmatprep.subr.bf16.mxu0 0
        %809 = vmatpush1.bf16.msra.mxu0 0
        %810 = vmatprep.mubr.bf16.mxu0 0
        %811 = vmatmul.mubr.bf16.gmra.mrb[0].mxu0 %v776
        %v812 = vpop.f32.mrb[0].mxu0
        %v813 = vadd.f32 0.0, %v812
        %v814 = vpop.f32.mrb[0].mxu0
        %v815 = vpop.f32.mrb[0].mxu0
        %v816 = vadd.f32 0.0, %v815
        %v817 = vpop.f32.mrb[0].mxu0
        %818 = vdwg.mxu0
        %v819 = vadd.f32 %v750, %v813
        %v820 = vadd.f32 %v751, %v816
        %821 = vst.msk [vmem:[%s749] sm:$0xff] %vm614, %v819
        %822 = vst.msk [vmem:[%s749 + $0x8] sm:$0xff] %vm614, %v820
        // Predicated region
        $region45: #{tpu_custom_call.1} parent=39 // pred_check
          %p823 = pneg %p272
        $region46: #{tpu_custom_call.1} parent=39 // pred_check_branch
          %825 = sbr.rel (%p823) target = $region48
        $region47: #{tpu_custom_call.1} parent=39 // pred_region
          %v826 = vld [vmem:[#allocation2] sm:$0xff]
          %v827 = vld [vmem:[#allocation2 + $0x8] sm:$0xff]
          %v828 = vld [vmem:[%s3] sm:$0xff]
          %v829 = vld [vmem:[%s3 + $0x8] sm:$0xff]
          %831 = vset.pattern.permute.xlu0 0
          %832 = vperm.xlu0 %831, %v828
          %v833 = vpop.permute.xlu0 %832
          %836 = vset.pattern.permute.xlu0 0
          %837 = vperm.xlu0 %836, %v829
          %v838 = vpop.permute.xlu0 %837
          %v840 = vadd.f32 %v826, %v833
          %v841 = vadd.f32 %v827, %v838
          %v842 = vmax.f32 %v840, 0.0
          %v843 = vmax.f32 %v841, 0.0
          %v844 = vpack.c.bf16 %v843, %v842
          %v845 = vld [vmem:[%s4] sm:$0xff]
          %v846 = vld [vmem:[%s4 + $0x8] sm:$0xff]
          %v847 = vld [vmem:[%s4 + $0x10] sm:$0xff]
          %v848 = vld [vmem:[%s4 + $0x18] sm:$0xff]
          %v849 = vld [vmem:[%s4 + $0x20] sm:$0x33]
          %v855 = vunpack.c.l.b16 %v845
          %v856 = vunpack.c.h.b16 %v845
          %v857 = vunpack.c.l.b16 %v846
          %v858 = vunpack.c.h.b16 %v846
          %v859 = vunpack.c.l.b16 %v847
          %v860 = vunpack.c.h.b16 %v847
          %v861 = vunpack.c.l.b16 %v848
          %v862 = vunpack.c.h.b16 %v848
          %v863 = vunpack.c.l.b16 %v849
          %v864 = vunpack.c.h.b16 %v849
          %v865 = vpack.c.b16 %v857, %v855
          %v866 = vpack.c.b16 %v858, %v856
          %v867 = vpack.c.b16 %v861, %v859
          %v868 = vpack.c.b16 %v862, %v860
          %v869 = vpack.c.b16 %v863, %v863
          %v870 = vpack.c.b16 %v864, %v864
          %v876 = vsel %vm614, %v844, 0
          %vm878 = vcmask 1041408
          %v880 = vsel %vm878, %v869, 0
          %v883 = vsel %vm878, %v870, 0
          %885 = vmatprep.subr.bf16.mxu0 %v866
          %886 = vmatpush1.bf16.msra.mxu0 %v865
          %887 = vmatprep.subr.bf16.mxu0 %v868
          %888 = vmatpush1.bf16.msra.mxu0 %v867
          %889 = vmatprep.subr.bf16.mxu0 %v883
          %890 = vmatpush1.bf16.msra.mxu0 %v880
          %891 = vmatprep.subr.bf16.mxu0 0
          %892 = vmatpush1.bf16.msra.mxu0 0
          %893 = vmatprep.subr.bf16.mxu0 0
          %894 = vmatpush1.bf16.msra.mxu0 0
          %895 = vmatprep.subr.bf16.mxu0 0
          %896 = vmatpush1.bf16.msra.mxu0 0
          %897 = vmatprep.subr.bf16.mxu0 0
          %898 = vmatpush1.bf16.msra.mxu0 0
          %899 = vmatprep.subr.bf16.mxu0 0
          %900 = vmatpush1.bf16.msra.mxu0 0
          %901 = vmatprep.subr.bf16.mxu0 0
          %902 = vmatpush1.bf16.msra.mxu0 0
          %903 = vmatprep.subr.bf16.mxu0 0
          %904 = vmatpush1.bf16.msra.mxu0 0
          %905 = vmatprep.subr.bf16.mxu0 0
          %906 = vmatpush1.bf16.msra.mxu0 0
          %907 = vmatprep.subr.bf16.mxu0 0
          %908 = vmatpush1.bf16.msra.mxu0 0
          %909 = vmatprep.subr.bf16.mxu0 0
          %910 = vmatpush1.bf16.msra.mxu0 0
          %911 = vmatprep.subr.bf16.mxu0 0
          %912 = vmatpush1.bf16.msra.mxu0 0
          %913 = vmatprep.subr.bf16.mxu0 0
          %914 = vmatpush1.bf16.msra.mxu0 0
          %915 = vmatprep.subr.bf16.mxu0 0
          %916 = vmatpush1.bf16.msra.mxu0 0
          %917 = vmatprep.mubr.bf16.mxu0 0
          %918 = vmatmul.mubr.bf16.gmra.mrb[0].mxu0 %v876
          %v919 = vpop.f32.mrb[0].mxu0
          %v920 = vadd.f32 0.0, %v919
          %v921 = vpop.f32.mrb[0].mxu0
          %v922 = vadd.f32 0.0, %v921
          %v923 = vpop.f32.mrb[0].mxu0
          %v924 = vadd.f32 0.0, %v923
          %v925 = vpop.f32.mrb[0].mxu0
          %v926 = vadd.f32 0.0, %v925
          %927 = vdwg.mxu0
          %928 = vst [vmem:[%s255] sm:$0xff] %v920
          %929 = vst [vmem:[%s255 + $0x8] sm:$0xff] %v922
          %930 = vst [vmem:[%s255 + $0x10] sm:$0xff] %v924
          %931 = vst [vmem:[%s255 + $0x18] sm:$0xff] %v926
          %v932 = vld [vmem:[%s617] sm:$0xff]
          %v933 = vld [vmem:[%s617 + $0x8] sm:$0xff]
          %s934 = scalar_lea.vmem %s3, 16
          %v935 = vld [vmem:[%s934] sm:$0xff]
          %v936 = vld [vmem:[%s934 + $0x8] sm:$0xff]
          %938 = vset.pattern.permute.xlu0 0
          %939 = vperm.xlu0 %938, %v935
          %v940 = vpop.permute.xlu0 %939
          %943 = vset.pattern.permute.xlu0 0
          %944 = vperm.xlu0 %943, %v936
          %v945 = vpop.permute.xlu0 %944
          %v947 = vadd.f32 %v932, %v940
          %v948 = vadd.f32 %v933, %v945
          %v949 = vmax.f32 %v947, 0.0
          %v950 = vmax.f32 %v948, 0.0
          %v951 = vpack.c.bf16 %v950, %v949
          %s952 = scalar_lea.vmem %s4, 40
          %v953 = vld [vmem:[%s952] sm:$0xff]
          %v954 = vld [vmem:[%s952 + $0x8] sm:$0xff]
          %v955 = vld [vmem:[%s952 + $0x10] sm:$0xff]
          %v956 = vld [vmem:[%s952 + $0x18] sm:$0xff]
          %v957 = vld [vmem:[%s952 + $0x20] sm:$0x33]
          %v963 = vunpack.c.l.b16 %v953
          %v964 = vunpack.c.h.b16 %v953
          %v965 = vunpack.c.l.b16 %v954
          %v966 = vunpack.c.h.b16 %v954
          %v967 = vunpack.c.l.b16 %v955
          %v968 = vunpack.c.h.b16 %v955
          %v969 = vunpack.c.l.b16 %v956
          %v970 = vunpack.c.h.b16 %v956
          %v971 = vunpack.c.l.b16 %v957
          %v972 = vunpack.c.h.b16 %v957
          %v973 = vpack.c.b16 %v965, %v963
          %v974 = vpack.c.b16 %v966, %v964
          %v975 = vpack.c.b16 %v969, %v967
          %v976 = vpack.c.b16 %v970, %v968
          %v977 = vpack.c.b16 %v971, %v971
          %v978 = vpack.c.b16 %v972, %v972
          %v984 = vsel %vm614, %v951, 0
          %v987 = vsel %vm878, %v977, 0
          %v990 = vsel %vm878, %v978, 0
          %992 = vmatprep.subr.bf16.mxu0 %v974
          %993 = vmatpush1.bf16.msra.mxu0 %v973
          %994 = vmatprep.subr.bf16.mxu0 %v976
          %995 = vmatpush1.bf16.msra.mxu0 %v975
          %996 = vmatprep.subr.bf16.mxu0 %v990
          %997 = vmatpush1.bf16.msra.mxu0 %v987
          %998 = vmatprep.subr.bf16.mxu0 0
          %999 = vmatpush1.bf16.msra.mxu0 0
          %1000 = vmatprep.subr.bf16.mxu0 0
          %1001 = vmatpush1.bf16.msra.mxu0 0
          %1002 = vmatprep.subr.bf16.mxu0 0
          %1003 = vmatpush1.bf16.msra.mxu0 0
          %1004 = vmatprep.subr.bf16.mxu0 0
          %1005 = vmatpush1.bf16.msra.mxu0 0
          %1006 = vmatprep.subr.bf16.mxu0 0
          %1007 = vmatpush1.bf16.msra.mxu0 0
          %1008 = vmatprep.subr.bf16.mxu0 0
          %1009 = vmatpush1.bf16.msra.mxu0 0
          %1010 = vmatprep.subr.bf16.mxu0 0
          %1011 = vmatpush1.bf16.msra.mxu0 0
          %1012 = vmatprep.subr.bf16.mxu0 0
          %1013 = vmatpush1.bf16.msra.mxu0 0
          %1014 = vmatprep.subr.bf16.mxu0 0
          %1015 = vmatpush1.bf16.msra.mxu0 0
          %1016 = vmatprep.subr.bf16.mxu0 0
          %1017 = vmatpush1.bf16.msra.mxu0 0
          %1018 = vmatprep.subr.bf16.mxu0 0
          %1019 = vmatpush1.bf16.msra.mxu0 0
          %1020 = vmatprep.subr.bf16.mxu0 0
          %1021 = vmatpush1.bf16.msra.mxu0 0
          %1022 = vmatprep.subr.bf16.mxu0 0
          %1023 = vmatpush1.bf16.msra.mxu0 0
          %1024 = vmatprep.mubr.bf16.mxu0 0
          %1025 = vmatmul.mubr.bf16.gmra.mrb[0].mxu0 %v984
          %v1026 = vpop.f32.mrb[0].mxu0
          %v1027 = vadd.f32 0.0, %v1026
          %v1028 = vpop.f32.mrb[0].mxu0
          %v1029 = vadd.f32 0.0, %v1028
          %v1030 = vpop.f32.mrb[0].mxu0
          %v1031 = vadd.f32 0.0, %v1030
          %v1032 = vpop.f32.mrb[0].mxu0
          %v1033 = vadd.f32 0.0, %v1032
          %1034 = vdwg.mxu0
          %s1035 = scalar_lea.vmem %s255, 32 [#allocation3]
          %1036 = vst [vmem:[%s1035] sm:$0xff] %v1027
          %1037 = vst [vmem:[%s1035 + $0x8] sm:$0xff] %v1029
          %1038 = vst [vmem:[%s1035 + $0x10] sm:$0xff] %v1031
          %1039 = vst [vmem:[%s1035 + $0x18] sm:$0xff] %v1033
          %v1040 = vld [vmem:[%s684] sm:$0xff]
          %v1041 = vld [vmem:[%s684 + $0x8] sm:$0xff]
          %s1042 = scalar_lea.vmem %s3, 32
          %v1043 = vld [vmem:[%s1042] sm:$0xff]
          %v1044 = vld [vmem:[%s1042 + $0x8] sm:$0xff]
          %1046 = vset.pattern.permute.xlu0 0
          %1047 = vperm.xlu0 %1046, %v1043
          %v1048 = vpop.permute.xlu0 %1047
          %1051 = vset.pattern.permute.xlu0 0
          %1052 = vperm.xlu0 %1051, %v1044
          %v1053 = vpop.permute.xlu0 %1052
          %v1055 = vadd.f32 %v1040, %v1048
          %v1056 = vadd.f32 %v1041, %v1053
          %v1057 = vmax.f32 %v1055, 0.0
          %v1058 = vmax.f32 %v1056, 0.0
          %v1059 = vpack.c.bf16 %v1058, %v1057
          %s1060 = scalar_lea.vmem %s4, 80
          %v1061 = vld [vmem:[%s1060] sm:$0xff]
          %v1062 = vld [vmem:[%s1060 + $0x8] sm:$0xff]
          %v1063 = vld [vmem:[%s1060 + $0x10] sm:$0xff]
          %v1064 = vld [vmem:[%s1060 + $0x18] sm:$0xff]
          %v1065 = vld [vmem:[%s1060 + $0x20] sm:$0x33]
          %v1071 = vunpack.c.l.b16 %v1061
          %v1072 = vunpack.c.h.b16 %v1061
          %v1073 = vunpack.c.l.b16 %v1062
          %v1074 = vunpack.c.h.b16 %v1062
          %v1075 = vunpack.c.l.b16 %v1063
          %v1076 = vunpack.c.h.b16 %v1063
          %v1077 = vunpack.c.l.b16 %v1064
          %v1078 = vunpack.c.h.b16 %v1064
          %v1079 = vunpack.c.l.b16 %v1065
          %v1080 = vunpack.c.h.b16 %v1065
          %v1081 = vpack.c.b16 %v1073, %v1071
          %v1082 = vpack.c.b16 %v1074, %v1072
          %v1083 = vpack.c.b16 %v1077, %v1075
          %v1084 = vpack.c.b16 %v1078, %v1076
          %v1085 = vpack.c.b16 %v1079, %v1079
          %v1086 = vpack.c.b16 %v1080, %v1080
          %v1092 = vsel %vm614, %v1059, 0
          %v1095 = vsel %vm878, %v1085, 0
          %v1098 = vsel %vm878, %v1086, 0
          %1100 = vmatprep.subr.bf16.mxu0 %v1082
          %1101 = vmatpush1.bf16.msra.mxu0 %v1081
          %1102 = vmatprep.subr.bf16.mxu0 %v1084
          %1103 = vmatpush1.bf16.msra.mxu0 %v1083
          %1104 = vmatprep.subr.bf16.mxu0 %v1098
          %1105 = vmatpush1.bf16.msra.mxu0 %v1095
          %1106 = vmatprep.subr.bf16.mxu0 0
          %1107 = vmatpush1.bf16.msra.mxu0 0
          %1108 = vmatprep.subr.bf16.mxu0 0
          %1109 = vmatpush1.bf16.msra.mxu0 0
          %1110 = vmatprep.subr.bf16.mxu0 0
          %1111 = vmatpush1.bf16.msra.mxu0 0
          %1112 = vmatprep.subr.bf16.mxu0 0
          %1113 = vmatpush1.bf16.msra.mxu0 0
          %1114 = vmatprep.subr.bf16.mxu0 0
          %1115 = vmatpush1.bf16.msra.mxu0 0
          %1116 = vmatprep.subr.bf16.mxu0 0
          %1117 = vmatpush1.bf16.msra.mxu0 0
          %1118 = vmatprep.subr.bf16.mxu0 0
          %1119 = vmatpush1.bf16.msra.mxu0 0
          %1120 = vmatprep.subr.bf16.mxu0 0
          %1121 = vmatpush1.bf16.msra.mxu0 0
          %1122 = vmatprep.subr.bf16.mxu0 0
          %1123 = vmatpush1.bf16.msra.mxu0 0
          %1124 = vmatprep.subr.bf16.mxu0 0
          %1125 = vmatpush1.bf16.msra.mxu0 0
          %1126 = vmatprep.subr.bf16.mxu0 0
          %1127 = vmatpush1.bf16.msra.mxu0 0
          %1128 = vmatprep.subr.bf16.mxu0 0
          %1129 = vmatpush1.bf16.msra.mxu0 0
          %1130 = vmatprep.subr.bf16.mxu0 0
          %1131 = vmatpush1.bf16.msra.mxu0 0
          %1132 = vmatprep.mubr.bf16.mxu0 0
          %1133 = vmatmul.mubr.bf16.gmra.mrb[0].mxu0 %v1092
          %v1134 = vpop.f32.mrb[0].mxu0
          %v1135 = vadd.f32 0.0, %v1134
          %v1136 = vpop.f32.mrb[0].mxu0
          %v1137 = vadd.f32 0.0, %v1136
          %v1138 = vpop.f32.mrb[0].mxu0
          %v1139 = vadd.f32 0.0, %v1138
          %v1140 = vpop.f32.mrb[0].mxu0
          %v1141 = vadd.f32 0.0, %v1140
          %1142 = vdwg.mxu0
          %s1143 = scalar_lea.vmem %s255, 64 [#allocation3]
          %1144 = vst [vmem:[%s1143] sm:$0xff] %v1135
          %1145 = vst [vmem:[%s1143 + $0x8] sm:$0xff] %v1137
          %1146 = vst [vmem:[%s1143 + $0x10] sm:$0xff] %v1139
          %1147 = vst [vmem:[%s1143 + $0x18] sm:$0xff] %v1141
          %v1148 = vld [vmem:[%s749] sm:$0xff]
          %v1149 = vld [vmem:[%s749 + $0x8] sm:$0xff]
          %s1150 = scalar_lea.vmem %s3, 48
          %v1151 = vld [vmem:[%s1150] sm:$0xff]
          %v1152 = vld [vmem:[%s1150 + $0x8] sm:$0xff]
          %1154 = vset.pattern.permute.xlu0 0
          %1155 = vperm.xlu0 %1154, %v1151
          %v1156 = vpop.permute.xlu0 %1155
          %1159 = vset.pattern.permute.xlu0 0
          %1160 = vperm.xlu0 %1159, %v1152
          %v1161 = vpop.permute.xlu0 %1160
          %v1163 = vadd.f32 %v1148, %v1156
          %v1164 = vadd.f32 %v1149, %v1161
          %v1165 = vmax.f32 %v1163, 0.0
          %v1166 = vmax.f32 %v1164, 0.0
          %v1167 = vpack.c.bf16 %v1166, %v1165
          %s1168 = scalar_lea.vmem %s4, 120
          %v1169 = vld [vmem:[%s1168] sm:$0xff]
          %v1170 = vld [vmem:[%s1168 + $0x8] sm:$0xff]
          %v1171 = vld [vmem:[%s1168 + $0x10] sm:$0xff]
          %v1172 = vld [vmem:[%s1168 + $0x18] sm:$0xff]
          %v1173 = vld [vmem:[%s1168 + $0x20] sm:$0x33]
          %v1179 = vunpack.c.l.b16 %v1169
          %v1180 = vunpack.c.h.b16 %v1169
          %v1181 = vunpack.c.l.b16 %v1170
          %v1182 = vunpack.c.h.b16 %v1170
          %v1183 = vunpack.c.l.b16 %v1171
          %v1184 = vunpack.c.h.b16 %v1171
          %v1185 = vunpack.c.l.b16 %v1172
          %v1186 = vunpack.c.h.b16 %v1172
          %v1187 = vunpack.c.l.b16 %v1173
          %v1188 = vunpack.c.h.b16 %v1173
          %v1189 = vpack.c.b16 %v1181, %v1179
          %v1190 = vpack.c.b16 %v1182, %v1180
          %v1191 = vpack.c.b16 %v1185, %v1183
          %v1192 = vpack.c.b16 %v1186, %v1184
          %v1193 = vpack.c.b16 %v1187, %v1187
          %v1194 = vpack.c.b16 %v1188, %v1188
          %v1200 = vsel %vm614, %v1167, 0
          %v1203 = vsel %vm878, %v1193, 0
          %v1206 = vsel %vm878, %v1194, 0
          %1208 = vmatprep.subr.bf16.mxu0 %v1190
          %1209 = vmatpush1.bf16.msra.mxu0 %v1189
          %1210 = vmatprep.subr.bf16.mxu0 %v1192
          %1211 = vmatpush1.bf16.msra.mxu0 %v1191
          %1212 = vmatprep.subr.bf16.mxu0 %v1206
          %1213 = vmatpush1.bf16.msra.mxu0 %v1203
          %1214 = vmatprep.subr.bf16.mxu0 0
          %1215 = vmatpush1.bf16.msra.mxu0 0
          %1216 = vmatprep.subr.bf16.mxu0 0
          %1217 = vmatpush1.bf16.msra.mxu0 0
          %1218 = vmatprep.subr.bf16.mxu0 0
          %1219 = vmatpush1.bf16.msra.mxu0 0
          %1220 = vmatprep.subr.bf16.mxu0 0
          %1221 = vmatpush1.bf16.msra.mxu0 0
          %1222 = vmatprep.subr.bf16.mxu0 0
          %1223 = vmatpush1.bf16.msra.mxu0 0
          %1224 = vmatprep.subr.bf16.mxu0 0
          %1225 = vmatpush1.bf16.msra.mxu0 0
          %1226 = vmatprep.subr.bf16.mxu0 0
          %1227 = vmatpush1.bf16.msra.mxu0 0
          %1228 = vmatprep.subr.bf16.mxu0 0
          %1229 = vmatpush1.bf16.msra.mxu0 0
          %1230 = vmatprep.subr.bf16.mxu0 0
          %1231 = vmatpush1.bf16.msra.mxu0 0
          %1232 = vmatprep.subr.bf16.mxu0 0
          %1233 = vmatpush1.bf16.msra.mxu0 0
          %1234 = vmatprep.subr.bf16.mxu0 0
          %1235 = vmatpush1.bf16.msra.mxu0 0
          %1236 = vmatprep.subr.bf16.mxu0 0
          %1237 = vmatpush1.bf16.msra.mxu0 0
          %1238 = vmatprep.subr.bf16.mxu0 0
          %1239 = vmatpush1.bf16.msra.mxu0 0
          %1240 = vmatprep.mubr.bf16.mxu0 0
          %1241 = vmatmul.mubr.bf16.gmra.mrb[0].mxu0 %v1200
          %v1242 = vpop.f32.mrb[0].mxu0
          %v1243 = vadd.f32 0.0, %v1242
          %v1244 = vpop.f32.mrb[0].mxu0
          %v1245 = vadd.f32 0.0, %v1244
          %v1246 = vpop.f32.mrb[0].mxu0
          %v1247 = vadd.f32 0.0, %v1246
          %v1248 = vpop.f32.mrb[0].mxu0
          %v1249 = vadd.f32 0.0, %v1248
          %1250 = vdwg.mxu0
          %s1251 = scalar_lea.vmem %s255, 96 [#allocation3]
          %1252 = vst [vmem:[%s1251] sm:$0xff] %v1243
          %1253 = vst [vmem:[%s1251 + $0x8] sm:$0xff] %v1245
          %1254 = vst [vmem:[%s1251 + $0x10] sm:$0xff] %v1247
          %1255 = vst [vmem:[%s1251 + $0x18] sm:$0xff] %v1249
        $region48: #{tpu_custom_call.1} parent=39 // pred_fallthru
          _
        %s1256 = sand.u32 %s156, 1
        %s1257 = scalar_lea.sflag [#allocation4], %s1256
        %s1258 = sand.u32 %s156, 1
        %s1259 = smul.addr %s1258, 128
        %s1260 = scalar_lea.vmem [#allocation3], %s1259
        // Predicated region
        $region49: #{tpu_custom_call.1} parent=39 // pred_check
          %p1261 = pneg %p166
        $region50: #{tpu_custom_call.1} parent=39 // pred_check_branch
          %1263 = sbr.rel (%p1261) target = $region52
        $region51: #{tpu_custom_call.1} parent=39 // pred_region
          %s1265 = ssub.s32 2048, 2048
          %1266 = vsyncadd %s1257, %s1265
          %s1267 = smul.addr %s23, 16
          %s1268 = smul.addr %s1267, 128
          %s1269 = scalar_lea.hbm %s5, %s1268
          %s1270 = sshll.u32 %s1260, 4
          %s1271 = int_to_ptr.vmem [resolvable:$true] %s1270
          %1276 = dma.vmem_to_hbm [thread:$0]  %s1271, 2048, %s1269, %s1257, 256, 256, 16
        $region52: #{tpu_custom_call.1} parent=39 // pred_fallthru
          _
      $region40: #{tpu_custom_call.1} parent=5 // pred_fallthru
        _
      %p1277 = scmp.le.s32.totalorder 2, %s14
      // Predicated region
      $region53: #{tpu_custom_call.1} parent=5 // pred_check
        %p1278 = pneg %p1277
      $region54: #{tpu_custom_call.1} parent=5 // pred_check_branch
        %1280 = sbr.rel (%p1278) target = $region56
      $region55: #{tpu_custom_call.1} parent=5 // pred_region
        %s1281 = ssub.s32 %s14, 2
        // Predicated region
        $region57: #{tpu_custom_call.1} parent=55 // pred_check
          %p1282 = pneg %p172
        $region58: #{tpu_custom_call.1} parent=55 // pred_check_branch
          %1284 = sbr.rel (%p1282) target = $region60
        $region59: #{tpu_custom_call.1} parent=55 // pred_region
          %s1285 = sand.u32 %s157, 1
          %s1286 = scalar_lea.sflag [#allocation4], %s1285
          %s1287 = sand.u32 %s157, 1
          %s1288 = smul.addr %s1287, 128
          %s1289 = scalar_lea.vmem [#allocation3], %s1288
          %1290 = dma.done %s1286, 2048
        $region60: #{tpu_custom_call.1} parent=55 // pred_fallthru
          _
      $region56: #{tpu_custom_call.1} parent=5 // pred_fallthru
        _
    $region6: #{tpu_custom_call.1} parent=1 // loop_footer
      %s18 = sadd.s32 1, %s14
    $region7: #{tpu_custom_call.1} parent=1 // loop_footer_branch
      %13 = sbr.rel target = $region3
    $region8: #{tpu_custom_call.1} parent=1 // loop_exit
      _
    %1291 = vsyncpa [#allocation4], 1
    %s1292 = scalar_lea.sflag [#allocation4], 1
    %1293 = vsyncpa %s1292, 1

</llo_original>
